<compile_context>
chip_gen: v7x
topology: tpu7x:2x2x1
jax: 0.10.0
libtpu: 0.0.40
codegen_flags: <defaults>
</compile_context>

<pallas_src>
import jax
import jax.numpy as jnp
from jax.experimental import pallas as pl
from jax.experimental.pallas import tpu as pltpu

HIDDEN = 512
BN_EPS = 1e-5
LANE = 128
MAX_TILE = 1024    # largest batch tile; keeps total VMEM well under v5e's 16 MiB default
MIN_SPLIT = 128    # below this, one tile (grid=1); above, keep >= 2 grid steps for v7x


def _cdiv(a, b):
    return -(-a // b)


def _round_up(x, m):
    return _cdiv(x, m) * m


def _choose_tile(B):
    """Pick the batch tile: large (overhead-amortizing), minimal padding,
    and >= 2 grid steps when the batch is big enough (v7x dual TensorCore)."""
    if B <= MIN_SPLIT:
        return _round_up(max(B, 1), 8)
    n = max(2, _cdiv(B, MAX_TILE))               # number of grid steps
    return min(MAX_TILE, _round_up(_cdiv(B, n), 8))


def get_action_kernel(s_ref, t_ref,              # (tm, state_dim), (tm, t_dim)   bf16
                      w1s_ref, w1t_ref, sh1_ref,  # (state_dim,512),(t_dim,512) bf16, (1,512) f32
                      w2_ref, sh2_ref,            # (512, 512) bf16, (1, 512) f32
                      w3_ref, sh3_ref,            # (512, 512) bf16, (1, 512) f32
                      w4_ref, b4_ref,             # (512, act_pad) bf16, (1, act_pad) f32
                      out_ref):                   # (tm, act_pad) bf16
    # Layer 1: concat(s, T) @ W1  ==  s @ W1_s + T @ W1_t  (BN scale pre-folded).
    h = (jnp.dot(s_ref[...], w1s_ref[...], preferred_element_type=jnp.float32) +
         jnp.dot(t_ref[...], w1t_ref[...], preferred_element_type=jnp.float32))
    h = jnp.maximum(h + sh1_ref[...], 0.0)

    h = jnp.dot(h.astype(jnp.bfloat16), w2_ref[...],
                preferred_element_type=jnp.float32)
    h = jnp.maximum(h + sh2_ref[...], 0.0)

    h = jnp.dot(h.astype(jnp.bfloat16), w3_ref[...],
                preferred_element_type=jnp.float32)
    h = jnp.maximum(h + sh3_ref[...], 0.0)

    # TODO(synk): Dropout(0.5) is identity in inference mode; training-mode
    # random dropping is intentionally not modelled here.

    f = jnp.dot(h.astype(jnp.bfloat16), w4_ref[...],
                preferred_element_type=jnp.float32) + b4_ref[...]
    out_ref[...] = jnp.tanh(f).astype(out_ref.dtype)


def get_action_forward(s, T, params):
    """Runs GetAction.forward inside one pallas_call (batch tiled on a 1-D grid)."""
    state_dim = params["state_dim"]
    t_dim = params["t_dim"]
    act_dim = params["act_dim"]
    act_pad = params["w4"].shape[1]

    # bf16 at the boundary: halves input DMA, matches MXU operand dtype.
    s = s.reshape(-1, state_dim).astype(jnp.bfloat16)
    T = T.reshape(-1, t_dim).astype(jnp.bfloat16)
    B = s.shape[0]

    tm = _choose_tile(B)
    B_pad = _round_up(B, tm)
    if B_pad != B:
        # Tile choice keeps this to a handful of rows, not a full-batch copy.
        s = jnp.pad(s, ((0, B_pad - B), (0, 0)))
        T = jnp.pad(T, ((0, B_pad - B), (0, 0)))

    grid = (B_pad // tm,)

    row_map = lambda i: (i, 0)      # per-batch-tile blocks
    const_map = lambda i: (0, 0)    # weights: same block every step -> VMEM-resident

    in_specs = [
        pl.BlockSpec((tm, state_dim), row_map),
        pl.BlockSpec((tm, t_dim), row_map),
        pl.BlockSpec((state_dim, HIDDEN), const_map),
        pl.BlockSpec((t_dim, HIDDEN), const_map),
        pl.BlockSpec((1, HIDDEN), const_map),
        pl.BlockSpec((HIDDEN, HIDDEN), const_map),
        pl.BlockSpec((1, HIDDEN), const_map),
        pl.BlockSpec((HIDDEN, HIDDEN), const_map),
        pl.BlockSpec((1, HIDDEN), const_map),
        pl.BlockSpec((HIDDEN, act_pad), const_map),
        pl.BlockSpec((1, act_pad), const_map),
    ]
    out_specs = pl.BlockSpec((tm, act_pad), row_map)

    out = pl.pallas_call(
        get_action_kernel,
        out_shape=jax.ShapeDtypeStruct((B_pad, act_pad), jnp.bfloat16),
        grid=grid,
        in_specs=in_specs,
        out_specs=out_specs,
        compiler_params=pltpu.CompilerParams(
            dimension_semantics=("parallel",)),
    )(s, T,
      params["w1s"], params["w1t"], params["sh1"],
      params["w2"], params["sh2"],
      params["w3"], params["sh3"],
      params["w4"], params["b4"])

    return out[:B, :act_dim]


def _init_linear(key, fan_in, fan_out):
    """PyTorch-style uniform(-1/sqrt(fan_in), 1/sqrt(fan_in)) init."""
    kw, kb = jax.random.split(key)
    bound = 1.0 / jnp.sqrt(fan_in)
    w = jax.random.uniform(kw, (fan_in, fan_out), jnp.float32, -bound, bound)
    b = jax.random.uniform(kb, (fan_out,), jnp.float32, -bound, bound)
    return w, b


def init_params(key, state_dim, t_dim, act_dim):
    in_dim = state_dim + t_dim
    k1, k2, k3, k4 = jax.random.split(key, 4)
    w1, b1 = _init_linear(k1, in_dim, HIDDEN)
    w2, b2 = _init_linear(k2, HIDDEN, HIDDEN)
    w3, b3 = _init_linear(k3, HIDDEN, HIDDEN)
    w4, b4 = _init_linear(k4, HIDDEN, act_dim)

    # Fresh nn.BatchNorm1d (eval): gamma=1, beta=0, running_mean=0, running_var=1.
    #   y = (x@W + b) * scale  ->  x @ (W*scale) + (b*scale)
    # TODO(synk): if trained BN stats / affine params are ever loaded, fold the
    # real (gamma, beta, mean, var) here instead of the fresh-init values.
    bn_scale = 1.0 / jnp.sqrt(1.0 + BN_EPS)

    def fold(w, b):
        return (w * bn_scale).astype(jnp.bfloat16), (b * bn_scale).reshape(1, HIDDEN)

    w1b, sh1 = fold(w1, b1)
    w2b, sh2 = fold(w2, b2)
    w3b, sh3 = fold(w3, b3)

    # Split layer-1 weight so the kernel never needs concat(s, T).
    w1s = w1b[:state_dim]
    w1t = w1b[state_dim:]

    # Pad the final output dim to a lane multiple so stores are lane-dense.
    act_pad = _round_up(act_dim, LANE)
    w4p = jnp.zeros((HIDDEN, act_pad), jnp.float32).at[:, :act_dim].set(w4)
    b4p = jnp.zeros((1, act_pad), jnp.float32).at[0, :act_dim].set(b4)

    return {
        "state_dim": state_dim, "t_dim": t_dim, "act_dim": act_dim,
        "w1s": w1s, "w1t": w1t, "sh1": sh1,
        "w2": w2b, "sh2": sh2,
        "w3": w3b, "sh3": sh3,
        "w4": w4p.astype(jnp.bfloat16), "b4": b4p,
        # f32 copies for the pure-JAX reference check:
        "_ref": {"w1": w1 * bn_scale, "b1": b1 * bn_scale,
                 "w2": w2 * bn_scale, "b2": b2 * bn_scale,
                 "w3": w3 * bn_scale, "b3": b3 * bn_scale,
                 "w4": w4, "b4": b4},
    }


def reference_forward(s, T, params):
    """Pure-JAX f32 reference of GetAction.forward (eval semantics)."""
    p = params["_ref"]
    x = jnp.concatenate([s.reshape(-1, params["state_dim"]),
                         T.reshape(-1, params["t_dim"])], axis=-1)
    h = jnp.maximum(x @ p["w1"] + p["b1"], 0.0)
    h = jnp.maximum(h @ p["w2"] + p["b2"], 0.0)
    h = jnp.maximum(h @ p["w3"] + p["b3"], 0.0)
    return jnp.tanh(h @ p["w4"] + p["b4"])


if __name__ == "__main__":
    state_dim = 32
    t_dim = 16
    act_dim = 16
    batch = 8

    key = jax.random.PRNGKey(0)
    k_params, k_s, k_T = jax.random.split(key, 3)

    params = init_params(k_params, state_dim, t_dim, act_dim)

    s = jax.random.normal(k_s, (batch, state_dim), jnp.float32)
    T = jax.random.normal(k_T, (batch, t_dim), jnp.float32)

    out = get_action_forward(s, T, params)
    out = jax.block_until_ready(out)

    ref = reference_forward(s, T, params)

    assert out.shape == (batch, act_dim)
    assert bool(jnp.all(jnp.isfinite(out.astype(jnp.float32))))
    assert bool(jnp.all(jnp.abs(out.astype(jnp.float32)) <= 1.0))      # tanh range
    err = float(jnp.max(jnp.abs(out.astype(jnp.float32) - ref)))
    assert err < 3e-2, err

    print("KERNEL_OK")
</pallas_src>

<mosaic_0001>
module attributes {stable_mosaic.version = 11 : i64} {
  func.func @get_action_kernel(%arg0: i32, %arg1: memref<8x32xbf16, #tpu.memory_space<vmem>>, %arg2: memref<8x16xbf16, #tpu.memory_space<vmem>>, %arg3: memref<32x512xbf16, #tpu.memory_space<vmem>>, %arg4: memref<16x512xbf16, #tpu.memory_space<vmem>>, %arg5: memref<1x512xf32, #tpu.memory_space<vmem>>, %arg6: memref<512x512xbf16, #tpu.memory_space<vmem>>, %arg7: memref<1x512xf32, #tpu.memory_space<vmem>>, %arg8: memref<512x512xbf16, #tpu.memory_space<vmem>>, %arg9: memref<1x512xf32, #tpu.memory_space<vmem>>, %arg10: memref<512x128xbf16, #tpu.memory_space<vmem>>, %arg11: memref<1x128xf32, #tpu.memory_space<vmem>>, %arg12: memref<8x128xbf16, #tpu.memory_space<vmem>>) attributes {dimension_semantics = [#tpu.dimension_semantics<parallel>], iteration_bounds = array<i64: 1>, scalar_prefetch = 0 : i64, scratch_operands = 0 : i64, tpu.core_type = #tpu.core_type<tc>, window_params = [{transform_indices = @transform_0, window_bounds = array<i64: 8, 32>}, {transform_indices = @transform_1, window_bounds = array<i64: 8, 16>}, {pipeline_mode = #tpu.pipeline_mode<synchronous>, transform_indices = @transform_2, window_bounds = array<i64: 32, 512>}, {pipeline_mode = #tpu.pipeline_mode<synchronous>, transform_indices = @transform_3, window_bounds = array<i64: 16, 512>}, {pipeline_mode = #tpu.pipeline_mode<synchronous>, transform_indices = @transform_4, window_bounds = array<i64: 1, 512>}, {pipeline_mode = #tpu.pipeline_mode<synchronous>, transform_indices = @transform_5, window_bounds = array<i64: 512, 512>}, {pipeline_mode = #tpu.pipeline_mode<synchronous>, transform_indices = @transform_6, window_bounds = array<i64: 1, 512>}, {pipeline_mode = #tpu.pipeline_mode<synchronous>, transform_indices = @transform_7, window_bounds = array<i64: 512, 512>}, {pipeline_mode = #tpu.pipeline_mode<synchronous>, transform_indices = @transform_8, window_bounds = array<i64: 1, 512>}, {pipeline_mode = #tpu.pipeline_mode<synchronous>, transform_indices = @transform_9, window_bounds = array<i64: 512, 128>}, {pipeline_mode = #tpu.pipeline_mode<synchronous>, transform_indices = @transform_10, window_bounds = array<i64: 1, 128>}, {transform_indices = @transform_11, window_bounds = array<i64: 8, 128>}]} {
    %c0 = arith.constant 0 : index
    %c0_0 = arith.constant 0 : index
    %0 = vector.load %arg1[%c0, %c0_0] : memref<8x32xbf16, #tpu.memory_space<vmem>>, vector<8x32xbf16>
    %c0_1 = arith.constant 0 : index
    %c0_2 = arith.constant 0 : index
    %1 = vector.load %arg3[%c0_1, %c0_2] : memref<32x512xbf16, #tpu.memory_space<vmem>>, vector<32x512xbf16>
    %cst = arith.constant dense<0.000000e+00> : vector<8x512xf32>
    %2 = tpu.matmul %0, %1, %cst {dimension_numbers = #tpu.dot_dimension_numbers<[1], [0], [0], [1], [0, 0, 1, 1], [], []>} : vector<8x32xbf16>, vector<32x512xbf16>, vector<8x512xf32> -> vector<8x512xf32>
    %c0_3 = arith.constant 0 : index
    %c0_4 = arith.constant 0 : index
    %3 = vector.load %arg2[%c0_3, %c0_4] : memref<8x16xbf16, #tpu.memory_space<vmem>>, vector<8x16xbf16>
    %c0_5 = arith.constant 0 : index
    %c0_6 = arith.constant 0 : index
    %4 = vector.load %arg4[%c0_5, %c0_6] : memref<16x512xbf16, #tpu.memory_space<vmem>>, vector<16x512xbf16>
    %cst_7 = arith.constant dense<0.000000e+00> : vector<8x512xf32>
    %5 = tpu.matmul %3, %4, %cst_7 {dimension_numbers = #tpu.dot_dimension_numbers<[1], [0], [0], [1], [0, 0, 1, 1], [], []>} : vector<8x16xbf16>, vector<16x512xbf16>, vector<8x512xf32> -> vector<8x512xf32>
    %6 = arith.addf %2, %5 : vector<8x512xf32>
    %c0_8 = arith.constant 0 : index
    %c0_9 = arith.constant 0 : index
    %7 = vector.load %arg5[%c0_8, %c0_9] : memref<1x512xf32, #tpu.memory_space<vmem>>, vector<1x512xf32>
    %8 = vector.broadcast %7 : vector<1x512xf32> to vector<8x512xf32>
    %9 = arith.addf %6, %8 : vector<8x512xf32>
    %cst_10 = arith.constant 0.000000e+00 : f32
    %10 = vector.broadcast %cst_10 : f32 to vector<8x512xf32>
    %11 = arith.maximumf %9, %10 : vector<8x512xf32>
    %12 = arith.truncf %11 : vector<8x512xf32> to vector<8x512xbf16>
    %c0_11 = arith.constant 0 : index
    %c0_12 = arith.constant 0 : index
    %13 = vector.load %arg6[%c0_11, %c0_12] : memref<512x512xbf16, #tpu.memory_space<vmem>>, vector<512x512xbf16>
    %cst_13 = arith.constant dense<0.000000e+00> : vector<8x512xf32>
    %14 = tpu.matmul %12, %13, %cst_13 {dimension_numbers = #tpu.dot_dimension_numbers<[1], [0], [0], [1], [0, 0, 1, 1], [], []>} : vector<8x512xbf16>, vector<512x512xbf16>, vector<8x512xf32> -> vector<8x512xf32>
    %c0_14 = arith.constant 0 : index
    %c0_15 = arith.constant 0 : index
    %15 = vector.load %arg7[%c0_14, %c0_15] : memref<1x512xf32, #tpu.memory_space<vmem>>, vector<1x512xf32>
    %16 = vector.broadcast %15 : vector<1x512xf32> to vector<8x512xf32>
    %17 = arith.addf %14, %16 : vector<8x512xf32>
    %cst_16 = arith.constant 0.000000e+00 : f32
    %18 = vector.broadcast %cst_16 : f32 to vector<8x512xf32>
    %19 = arith.maximumf %17, %18 : vector<8x512xf32>
    %20 = arith.truncf %19 : vector<8x512xf32> to vector<8x512xbf16>
    %c0_17 = arith.constant 0 : index
    %c0_18 = arith.constant 0 : index
    %21 = vector.load %arg8[%c0_17, %c0_18] : memref<512x512xbf16, #tpu.memory_space<vmem>>, vector<512x512xbf16>
    %cst_19 = arith.constant dense<0.000000e+00> : vector<8x512xf32>
    %22 = tpu.matmul %20, %21, %cst_19 {dimension_numbers = #tpu.dot_dimension_numbers<[1], [0], [0], [1], [0, 0, 1, 1], [], []>} : vector<8x512xbf16>, vector<512x512xbf16>, vector<8x512xf32> -> vector<8x512xf32>
    %c0_20 = arith.constant 0 : index
    %c0_21 = arith.constant 0 : index
    %23 = vector.load %arg9[%c0_20, %c0_21] : memref<1x512xf32, #tpu.memory_space<vmem>>, vector<1x512xf32>
    %24 = vector.broadcast %23 : vector<1x512xf32> to vector<8x512xf32>
    %25 = arith.addf %22, %24 : vector<8x512xf32>
    %cst_22 = arith.constant 0.000000e+00 : f32
    %26 = vector.broadcast %cst_22 : f32 to vector<8x512xf32>
    %27 = arith.maximumf %25, %26 : vector<8x512xf32>
    %28 = arith.truncf %27 : vector<8x512xf32> to vector<8x512xbf16>
    %c0_23 = arith.constant 0 : index
    %c0_24 = arith.constant 0 : index
    %29 = vector.load %arg10[%c0_23, %c0_24] : memref<512x128xbf16, #tpu.memory_space<vmem>>, vector<512x128xbf16>
    %cst_25 = arith.constant dense<0.000000e+00> : vector<8x128xf32>
    %30 = tpu.matmul %28, %29, %cst_25 {dimension_numbers = #tpu.dot_dimension_numbers<[1], [0], [0], [1], [0, 0, 1, 1], [], []>} : vector<8x512xbf16>, vector<512x128xbf16>, vector<8x128xf32> -> vector<8x128xf32>
    %c0_26 = arith.constant 0 : index
    %c0_27 = arith.constant 0 : index
    %31 = vector.load %arg11[%c0_26, %c0_27] : memref<1x128xf32, #tpu.memory_space<vmem>>, vector<1x128xf32>
    %32 = vector.broadcast %31 : vector<1x128xf32> to vector<8x128xf32>
    %33 = arith.addf %30, %32 : vector<8x128xf32>
    %34 = math.tanh %33 : vector<8x128xf32>
    %35 = arith.truncf %34 : vector<8x128xf32> to vector<8x128xbf16>
    %c0_28 = arith.constant 0 : index
    %c0_29 = arith.constant 0 : index
    %36 = vector.load %arg12[%c0_28, %c0_29] : memref<8x128xbf16, #tpu.memory_space<vmem>>, vector<8x128xbf16>
    tpu.vector_store %arg12[%c0_28, %c0_29], %35 {strides = array<i32>} : memref<8x128xbf16, #tpu.memory_space<vmem>>, vector<8x128xbf16>,
    return
  }
  func.func @transform_0(%arg0: i32) -> (i32, i32) {
    %c0_i32 = arith.constant 0 : i32
    %c0_i32_0 = arith.constant 0 : i32
    return %arg0, %c0_i32 : i32, i32
  }
  func.func @transform_1(%arg0: i32) -> (i32, i32) {
    %c0_i32 = arith.constant 0 : i32
    %c0_i32_0 = arith.constant 0 : i32
    return %arg0, %c0_i32 : i32, i32
  }
  func.func @transform_2(%arg0: i32) -> (i32, i32) {
    %c0_i32 = arith.constant 0 : i32
    %c0_i32_0 = arith.constant 0 : i32
    %c0_i32_1 = arith.constant 0 : i32
    return %c0_i32, %c0_i32_0 : i32, i32
  }
  func.func @transform_3(%arg0: i32) -> (i32, i32) {
    %c0_i32 = arith.constant 0 : i32
    %c0_i32_0 = arith.constant 0 : i32
    %c0_i32_1 = arith.constant 0 : i32
    return %c0_i32, %c0_i32_0 : i32, i32
  }
  func.func @transform_4(%arg0: i32) -> (i32, i32) {
    %c0_i32 = arith.constant 0 : i32
    %c0_i32_0 = arith.constant 0 : i32
    %c0_i32_1 = arith.constant 0 : i32
    return %c0_i32, %c0_i32_0 : i32, i32
  }
  func.func @transform_5(%arg0: i32) -> (i32, i32) {
    %c0_i32 = arith.constant 0 : i32
    %c0_i32_0 = arith.constant 0 : i32
    %c0_i32_1 = arith.constant 0 : i32
    return %c0_i32, %c0_i32_0 : i32, i32
  }
  func.func @transform_6(%arg0: i32) -> (i32, i32) {
    %c0_i32 = arith.constant 0 : i32
    %c0_i32_0 = arith.constant 0 : i32
    %c0_i32_1 = arith.constant 0 : i32
    return %c0_i32, %c0_i32_0 : i32, i32
  }
  func.func @transform_7(%arg0: i32) -> (i32, i32) {
    %c0_i32 = arith.constant 0 : i32
    %c0_i32_0 = arith.constant 0 : i32
    %c0_i32_1 = arith.constant 0 : i32
    return %c0_i32, %c0_i32_0 : i32, i32
  }
  func.func @transform_8(%arg0: i32) -> (i32, i32) {
    %c0_i32 = arith.constant 0 : i32
    %c0_i32_0 = arith.constant 0 : i32
    %c0_i32_1 = arith.constant 0 : i32
    return %c0_i32, %c0_i32_0 : i32, i32
  }
  func.func @transform_9(%arg0: i32) -> (i32, i32) {
    %c0_i32 = arith.constant 0 : i32
    %c0_i32_0 = arith.constant 0 : i32
    %c0_i32_1 = arith.constant 0 : i32
    return %c0_i32, %c0_i32_0 : i32, i32
  }
  func.func @transform_10(%arg0: i32) -> (i32, i32) {
    %c0_i32 = arith.constant 0 : i32
    %c0_i32_0 = arith.constant 0 : i32
    %c0_i32_1 = arith.constant 0 : i32
    return %c0_i32, %c0_i32_0 : i32, i32
  }
  func.func @transform_11(%arg0: i32) -> (i32, i32) {
    %c0_i32 = arith.constant 0 : i32
    %c0_i32_0 = arith.constant 0 : i32
    return %arg0, %c0_i32 : i32, i32
  }
}

</mosaic_0001>

<llo_original>
// kernel: tpu_custom_call.1
$region0: #{tpu_custom_call.1}
  #allocation0 [shape = 'u32[]', space=smem, size = 0x4, offset = 0x4, fixed_abs, tag = 'smem constant byte address 0x4 - core index']
  #allocation1 [shape = 'u32[144,128]{1,0:T(1,128)}', space=vmem, size = 0x12000, scoped, tag = 'internal scratch']
  %s0 = inlined_call_operand.hbm [shape: bf16[8,32], index: 0, kind: input, shape index: {}]
  %s1 = inlined_call_operand.hbm [shape: bf16[8,16], index: 1, kind: input, shape index: {}]
  %s2 = inlined_call_operand.hbm [shape: bf16[32,512], index: 2, kind: input, shape index: {}]
  %s3 = inlined_call_operand.hbm [shape: bf16[16,512], index: 3, kind: input, shape index: {}]
  %s4 = inlined_call_operand.vmem [shape: f32[1,512], index: 4, kind: input, shape index: {}]
  %s5 = inlined_call_operand.hbm [shape: bf16[512,512], index: 5, kind: input, shape index: {}]
  %s6 = inlined_call_operand.vmem [shape: f32[1,512], index: 6, kind: input, shape index: {}]
  %s7 = inlined_call_operand.hbm [shape: bf16[512,512], index: 7, kind: input, shape index: {}]
  %s8 = inlined_call_operand.vmem [shape: f32[1,512], index: 8, kind: input, shape index: {}]
  %s9 = inlined_call_operand.hbm [shape: bf16[512,128], index: 9, kind: input, shape index: {}]
  %s10 = inlined_call_operand.vmem [shape: f32[1,128], index: 10, kind: input, shape index: {}]
  %s11 = inlined_call_operand.hbm [shape: bf16[8,128], index: 11, kind: output, shape index: {}]
  %s12 = sld [smem:[#allocation0]]
  $region82: #{tpu_custom_call.1} parent=0
    _
  %s14 = ssub.s32 1, %s12
  %s15 = scalar_select 0, %s14, %s12
  $region1: #{tpu_custom_call.1} parent=0
    #allocation2 [shape = 'u8[2048]{0}', space=vmem, size = 0x800, scoped, tag = 'input window, operand 0, single buffered']
    #allocation3 [shape = 's32[1]{0}', space=sflag, size = 0x4, scoped, tag = 'scoped memory for tpu_custom_call.1']
    #allocation4 [shape = 's32[1]{0}', space=sflag, size = 0x4, scoped, tag = 'scoped memory for tpu_custom_call.1']
    #allocation5 [shape = 'u8[2048]{0}', space=vmem, size = 0x800, scoped, tag = 'input window, operand 1, single buffered']
    #allocation6 [shape = 's32[1]{0}', space=sflag, size = 0x4, scoped, tag = 'scoped memory for tpu_custom_call.1']
    #allocation7 [shape = 'u8[32768]{0}', space=vmem, size = 0x8000, scoped, tag = 'input window, operand 2, single buffered']
    #allocation8 [shape = 'u8[16384]{0}', space=vmem, size = 0x4000, scoped, tag = 'input window, operand 3, single buffered']
    #allocation9 [shape = 's32[1]{0}', space=sflag, size = 0x4, scoped, tag = 'scoped memory for tpu_custom_call.1']
    #allocation10 [shape = 'u8[524288]{0}', space=vmem, size = 0x80000, scoped, tag = 'input window, operand 5, single buffered']
    #allocation11 [shape = 'u8[524288]{0}', space=vmem, size = 0x80000, scoped, tag = 'input window, operand 7, single buffered']
    #allocation12 [shape = 's32[1]{0}', space=sflag, size = 0x4, scoped, tag = 'scoped memory for tpu_custom_call.1']
    #allocation13 [shape = 'u8[131072]{0}', space=vmem, size = 0x20000, scoped, tag = 'input window, operand 9, single buffered']
    #allocation14 [shape = 'u8[2048]{0}', space=vmem, size = 0x800, scoped, tag = 'output window, operand 0, single buffered']
    %16 = vsyncpa [#allocation3], 0
    %17 = vsyncpa [#allocation6], 0
    %18 = vsyncpa [#allocation9], 0
    %19 = vsyncpa [#allocation12], 0
    %20 = vsyncpa [#allocation4], 0
    // Predicated region
    $region2: #{tpu_custom_call.1} parent=1 // pred_check
      _
    $region3: #{tpu_custom_call.1} parent=1 // pred_check_branch
      %22 = sbr.rel (0) target = $region5
    $region4: #{tpu_custom_call.1} parent=1 // pred_region
      %s24 = ssub.s32 64, 64
      %25 = vsyncadd [#allocation3], %s24
      %s27 = sshll.u32 [#allocation2], 4
      %s28 = int_to_ptr.vmem [resolvable:$true] %s27
      %30 = dma.hbm_to_vmem [thread:$0]  %s0, 64, %s28, [#allocation3]
    $region5: #{tpu_custom_call.1} parent=1 // pred_fallthru
      _
    // Predicated region
    $region6: #{tpu_custom_call.1} parent=1 // pred_check
      _
    $region7: #{tpu_custom_call.1} parent=1 // pred_check_branch
      %32 = sbr.rel (0) target = $region9
    $region8: #{tpu_custom_call.1} parent=1 // pred_region
      %s34 = ssub.s32 64, 64
      %35 = vsyncadd [#allocation6], %s34
      %s37 = sshll.u32 [#allocation5], 4
      %s38 = int_to_ptr.vmem [resolvable:$true] %s37
      %40 = dma.hbm_to_vmem [thread:$0]  %s1, 64, %s38, [#allocation6]
    $region9: #{tpu_custom_call.1} parent=1 // pred_fallthru
      _
    // Predicated region
    $region10: #{tpu_custom_call.1} parent=1 // pred_check
      _
    $region11: #{tpu_custom_call.1} parent=1 // pred_check_branch
      %42 = sbr.rel (0) target = $region13
    $region12: #{tpu_custom_call.1} parent=1 // pred_region
      %s44 = ssub.s32 1024, 1024
      %45 = vsyncadd [#allocation6], %s44
      %s46 = sshll.u32 [#allocation7], 4
      %s47 = int_to_ptr.vmem [resolvable:$true] %s46
      %52 = dma.hbm_to_vmem [thread:$0]  %s2, 1024, %s47, [#allocation6], 256, 256, 16
    $region13: #{tpu_custom_call.1} parent=1 // pred_fallthru
      _
    // Predicated region
    $region14: #{tpu_custom_call.1} parent=1 // pred_check
      _
    $region15: #{tpu_custom_call.1} parent=1 // pred_check_branch
      %54 = sbr.rel (0) target = $region17
    $region16: #{tpu_custom_call.1} parent=1 // pred_region
      %s56 = ssub.s32 512, 512
      %57 = vsyncadd [#allocation9], %s56
      %s58 = sshll.u32 [#allocation8], 4
      %s59 = int_to_ptr.vmem [resolvable:$true] %s58
      %64 = dma.hbm_to_vmem [thread:$0]  %s3, 512, %s59, [#allocation9], 256, 256, 16
    $region17: #{tpu_custom_call.1} parent=1 // pred_fallthru
      _
    // Predicated region
    $region18: #{tpu_custom_call.1} parent=1 // pred_check
      _
    $region19: #{tpu_custom_call.1} parent=1 // pred_check_branch
      %66 = sbr.rel (0) target = $region21
    $region20: #{tpu_custom_call.1} parent=1 // pred_region
      _
    $region21: #{tpu_custom_call.1} parent=1 // pred_fallthru
      _
    // Predicated region
    $region22: #{tpu_custom_call.1} parent=1 // pred_check
      _
    $region23: #{tpu_custom_call.1} parent=1 // pred_check_branch
      %68 = sbr.rel (0) target = $region25
    $region24: #{tpu_custom_call.1} parent=1 // pred_region
      %s70 = ssub.s32 16384, 16384
      %71 = vsyncadd [#allocation9], %s70
      %s72 = sshll.u32 [#allocation10], 4
      %s73 = int_to_ptr.vmem [resolvable:$true] %s72
      %78 = dma.hbm_to_vmem [thread:$0]  %s5, 16384, %s73, [#allocation9], 256, 256, 16
    $region25: #{tpu_custom_call.1} parent=1 // pred_fallthru
      _
    // Predicated region
    $region26: #{tpu_custom_call.1} parent=1 // pred_check
      _
    $region27: #{tpu_custom_call.1} parent=1 // pred_check_branch
      %80 = sbr.rel (0) target = $region29
    $region28: #{tpu_custom_call.1} parent=1 // pred_region
      _
    $region29: #{tpu_custom_call.1} parent=1 // pred_fallthru
      _
    // Predicated region
    $region30: #{tpu_custom_call.1} parent=1 // pred_check
      _
    $region31: #{tpu_custom_call.1} parent=1 // pred_check_branch
      %82 = sbr.rel (0) target = $region33
    $region32: #{tpu_custom_call.1} parent=1 // pred_region
      %s84 = ssub.s32 16384, 16384
      %85 = vsyncadd [#allocation12], %s84
      %s86 = sshll.u32 [#allocation11], 4
      %s87 = int_to_ptr.vmem [resolvable:$true] %s86
      %92 = dma.hbm_to_vmem [thread:$0]  %s7, 16384, %s87, [#allocation12], 256, 256, 16
    $region33: #{tpu_custom_call.1} parent=1 // pred_fallthru
      _
    // Predicated region
    $region34: #{tpu_custom_call.1} parent=1 // pred_check
      _
    $region35: #{tpu_custom_call.1} parent=1 // pred_check_branch
      %94 = sbr.rel (0) target = $region37
    $region36: #{tpu_custom_call.1} parent=1 // pred_region
      _
    $region37: #{tpu_custom_call.1} parent=1 // pred_fallthru
      _
    // Predicated region
    $region38: #{tpu_custom_call.1} parent=1 // pred_check
      _
    $region39: #{tpu_custom_call.1} parent=1 // pred_check_branch
      %96 = sbr.rel (0) target = $region41
    $region40: #{tpu_custom_call.1} parent=1 // pred_region
      %s98 = ssub.s32 4096, 4096
      %99 = vsyncadd [#allocation12], %s98
      %s100 = sshll.u32 [#allocation13], 4
      %s101 = int_to_ptr.vmem [resolvable:$true] %s100
      %106 = dma.hbm_to_vmem [thread:$0]  %s9, 4096, %s101, [#allocation12], 64, 64, 4
    $region41: #{tpu_custom_call.1} parent=1 // pred_fallthru
      _
    // Predicated region
    $region42: #{tpu_custom_call.1} parent=1 // pred_check
      _
    $region43: #{tpu_custom_call.1} parent=1 // pred_check_branch
      %108 = sbr.rel (0) target = $region45
    $region44: #{tpu_custom_call.1} parent=1 // pred_region
      _
    $region45: #{tpu_custom_call.1} parent=1 // pred_fallthru
      _
    // Predicated region
    $region46: #{tpu_custom_call.1} parent=1 // pred_check
      _
    $region47: #{tpu_custom_call.1} parent=1 // pred_check_branch
      %110 = sbr.rel (0) target = $region49
    $region48: #{tpu_custom_call.1} parent=1 // pred_region
      %111 = dma.done [#allocation3], 64
    $region49: #{tpu_custom_call.1} parent=1 // pred_fallthru
      _
    // Predicated region
    $region50: #{tpu_custom_call.1} parent=1 // pred_check
      _
    $region51: #{tpu_custom_call.1} parent=1 // pred_check_branch
      %113 = sbr.rel (0) target = $region53
    $region52: #{tpu_custom_call.1} parent=1 // pred_region
      %114 = dma.done [#allocation6], 64
    $region53: #{tpu_custom_call.1} parent=1 // pred_fallthru
      _
    // Predicated region
    $region54: #{tpu_custom_call.1} parent=1 // pred_check
      _
    $region55: #{tpu_custom_call.1} parent=1 // pred_check_branch
      %116 = sbr.rel (0) target = $region57
    $region56: #{tpu_custom_call.1} parent=1 // pred_region
      %117 = dma.done [#allocation6], 1024
    $region57: #{tpu_custom_call.1} parent=1 // pred_fallthru
      _
    // Predicated region
    $region58: #{tpu_custom_call.1} parent=1 // pred_check
      _
    $region59: #{tpu_custom_call.1} parent=1 // pred_check_branch
      %119 = sbr.rel (0) target = $region61
    $region60: #{tpu_custom_call.1} parent=1 // pred_region
      %120 = dma.done [#allocation9], 512
    $region61: #{tpu_custom_call.1} parent=1 // pred_fallthru
      _
    // Predicated region
    $region62: #{tpu_custom_call.1} parent=1 // pred_check
      _
    $region63: #{tpu_custom_call.1} parent=1 // pred_check_branch
      %122 = sbr.rel (0) target = $region65
    $region64: #{tpu_custom_call.1} parent=1 // pred_region
      %123 = dma.done [#allocation9], 16384
    $region65: #{tpu_custom_call.1} parent=1 // pred_fallthru
      _
    // Predicated region
    $region66: #{tpu_custom_call.1} parent=1 // pred_check
      _
    $region67: #{tpu_custom_call.1} parent=1 // pred_check_branch
      %125 = sbr.rel (0) target = $region69
    $region68: #{tpu_custom_call.1} parent=1 // pred_region
      %126 = dma.done [#allocation12], 16384
    $region69: #{tpu_custom_call.1} parent=1 // pred_fallthru
      _
    // Predicated region
    $region70: #{tpu_custom_call.1} parent=1 // pred_check
      _
    $region71: #{tpu_custom_call.1} parent=1 // pred_check_branch
      %128 = sbr.rel (0) target = $region73
    $region72: #{tpu_custom_call.1} parent=1 // pred_region
      %129 = dma.done [#allocation12], 4096
    $region73: #{tpu_custom_call.1} parent=1 // pred_fallthru
      _
    %v131 = vld [vmem:[#allocation2] sm:$0xf]
    %v132 = vld [vmem:[#allocation7] sm:$0xff]
    %v133 = vld [vmem:[#allocation7 + $0x8] sm:$0xff]
    %v134 = vld [vmem:[#allocation7 + $0x10] sm:$0xff]
    %v135 = vld [vmem:[#allocation7 + $0x18] sm:$0xff]
    %v136 = vld [vmem:[#allocation7 + $0x20] sm:$0xff]
    %v137 = vld [vmem:[#allocation7 + $0x28] sm:$0xff]
    %v138 = vld [vmem:[#allocation7 + $0x30] sm:$0xff]
    %v139 = vld [vmem:[#allocation7 + $0x38] sm:$0xff]
    %v140 = vld [vmem:[#allocation5] sm:$0xf]
    %v141 = vld [vmem:[#allocation8] sm:$0xff]
    %v142 = vld [vmem:[#allocation8 + $0x8] sm:$0xff]
    %v143 = vld [vmem:[#allocation8 + $0x10] sm:$0xff]
    %v144 = vld [vmem:[#allocation8 + $0x18] sm:$0xff]
    %v149 = vunpack.c.l.b16 %v141
    %v150 = vunpack.c.h.b16 %v141
    %v151 = vunpack.c.l.b16 %v142
    %v152 = vunpack.c.h.b16 %v142
    %v153 = vunpack.c.l.b16 %v143
    %v154 = vunpack.c.h.b16 %v143
    %v155 = vunpack.c.l.b16 %v144
    %v156 = vunpack.c.h.b16 %v144
    %v157 = vpack.c.b16 %v153, %v149
    %v158 = vpack.c.b16 %v154, %v150
    %v159 = vpack.c.b16 %v155, %v151
    %v160 = vpack.c.b16 %v156, %v152
    %vm165 = vcmask 130048
    %v167 = vsel %vm165, %v140, 0
    %169 = vmatprep.subr.bf16.mxu0 %v158
    %170 = vmatpush1.bf16.msra.mxu0 %v157
    %171 = vmatprep.subr.bf16.mxu0 0
    %172 = vmatpush1.bf16.msra.mxu0 0
    %173 = vmatprep.subr.bf16.mxu0 0
    %174 = vmatpush1.bf16.msra.mxu0 0
    %175 = vmatprep.subr.bf16.mxu0 0
    %176 = vmatpush1.bf16.msra.mxu0 0
    %177 = vmatprep.subr.bf16.mxu0 0
    %178 = vmatpush1.bf16.msra.mxu0 0
    %179 = vmatprep.subr.bf16.mxu0 0
    %180 = vmatpush1.bf16.msra.mxu0 0
    %181 = vmatprep.subr.bf16.mxu0 0
    %182 = vmatpush1.bf16.msra.mxu0 0
    %183 = vmatprep.subr.bf16.mxu0 0
    %184 = vmatpush1.bf16.msra.mxu0 0
    %185 = vmatprep.subr.bf16.mxu0 0
    %186 = vmatpush1.bf16.msra.mxu0 0
    %187 = vmatprep.subr.bf16.mxu0 0
    %188 = vmatpush1.bf16.msra.mxu0 0
    %189 = vmatprep.subr.bf16.mxu0 0
    %190 = vmatpush1.bf16.msra.mxu0 0
    %191 = vmatprep.subr.bf16.mxu0 0
    %192 = vmatpush1.bf16.msra.mxu0 0
    %193 = vmatprep.subr.bf16.mxu0 0
    %194 = vmatpush1.bf16.msra.mxu0 0
    %195 = vmatprep.subr.bf16.mxu0 0
    %196 = vmatpush1.bf16.msra.mxu0 0
    %197 = vmatprep.subr.bf16.mxu0 0
    %198 = vmatpush1.bf16.msra.mxu0 0
    %199 = vmatprep.subr.bf16.mxu0 0
    %200 = vmatpush1.bf16.msra.mxu0 0
    %201 = vmatprep.mubr.bf16.mxu0 0
    %202 = vmatmul.mubr.bf16.gmra.mrb[0].mxu0 %v167
    %v203 = vpop.f32.mrb[0].mxu0
    %v204 = vadd.f32 0.0, %v203
    %v205 = vpop.f32.mrb[0].mxu0
    %v206 = vadd.f32 0.0, %v205
    %v207 = vpop.f32.mrb[0].mxu0
    %v208 = vpop.f32.mrb[0].mxu0
    %209 = vdwg.mxu0
    %210 = vmatprep.subr.bf16.mxu0 %v160
    %211 = vmatpush1.bf16.msra.mxu0 %v159
    %212 = vmatprep.subr.bf16.mxu0 0
    %213 = vmatpush1.bf16.msra.mxu0 0
    %214 = vmatprep.subr.bf16.mxu0 0
    %215 = vmatpush1.bf16.msra.mxu0 0
    %216 = vmatprep.subr.bf16.mxu0 0
    %217 = vmatpush1.bf16.msra.mxu0 0
    %218 = vmatprep.subr.bf16.mxu0 0
    %219 = vmatpush1.bf16.msra.mxu0 0
    %220 = vmatprep.subr.bf16.mxu0 0
    %221 = vmatpush1.bf16.msra.mxu0 0
    %222 = vmatprep.subr.bf16.mxu0 0
    %223 = vmatpush1.bf16.msra.mxu0 0
    %224 = vmatprep.subr.bf16.mxu0 0
    %225 = vmatpush1.bf16.msra.mxu0 0
    %226 = vmatprep.subr.bf16.mxu0 0
    %227 = vmatpush1.bf16.msra.mxu0 0
    %228 = vmatprep.subr.bf16.mxu0 0
    %229 = vmatpush1.bf16.msra.mxu0 0
    %230 = vmatprep.subr.bf16.mxu0 0
    %231 = vmatpush1.bf16.msra.mxu0 0
    %232 = vmatprep.subr.bf16.mxu0 0
    %233 = vmatpush1.bf16.msra.mxu0 0
    %234 = vmatprep.subr.bf16.mxu0 0
    %235 = vmatpush1.bf16.msra.mxu0 0
    %236 = vmatprep.subr.bf16.mxu0 0
    %237 = vmatpush1.bf16.msra.mxu0 0
    %238 = vmatprep.subr.bf16.mxu0 0
    %239 = vmatpush1.bf16.msra.mxu0 0
    %240 = vmatprep.subr.bf16.mxu0 0
    %241 = vmatpush1.bf16.msra.mxu0 0
    %242 = vmatprep.mubr.bf16.mxu0 0
    %243 = vmatmul.mubr.bf16.gmra.mrb[0].mxu0 %v167
    %v244 = vpop.f32.mrb[0].mxu0
    %v245 = vadd.f32 0.0, %v244
    %v246 = vpop.f32.mrb[0].mxu0
    %v247 = vadd.f32 0.0, %v246
    %v248 = vpop.f32.mrb[0].mxu0
    %v249 = vpop.f32.mrb[0].mxu0
    %250 = vdwg.mxu0
    %v259 = vunpack.c.l.b16 %v132
    %v260 = vunpack.c.h.b16 %v132
    %v261 = vunpack.c.l.b16 %v133
    %v262 = vunpack.c.h.b16 %v133
    %v263 = vunpack.c.l.b16 %v134
    %v264 = vunpack.c.h.b16 %v134
    %v265 = vunpack.c.l.b16 %v135
    %v266 = vunpack.c.h.b16 %v135
    %v267 = vunpack.c.l.b16 %v136
    %v268 = vunpack.c.h.b16 %v136
    %v269 = vunpack.c.l.b16 %v137
    %v270 = vunpack.c.h.b16 %v137
    %v271 = vunpack.c.l.b16 %v138
    %v272 = vunpack.c.h.b16 %v138
    %v273 = vunpack.c.l.b16 %v139
    %v274 = vunpack.c.h.b16 %v139
    %v275 = vpack.c.b16 %v263, %v259
    %v276 = vpack.c.b16 %v264, %v260
    %v277 = vpack.c.b16 %v265, %v261
    %v278 = vpack.c.b16 %v266, %v262
    %v279 = vpack.c.b16 %v271, %v267
    %v280 = vpack.c.b16 %v272, %v268
    %v281 = vpack.c.b16 %v273, %v269
    %v282 = vpack.c.b16 %v274, %v270
    %vm291 = vcmask 261120
    %v293 = vsel %vm291, %v131, 0
    %295 = vmatprep.subr.bf16.mxu0 %v276
    %296 = vmatpush1.bf16.msra.mxu0 %v275
    %297 = vmatprep.subr.bf16.mxu0 %v280
    %298 = vmatpush1.bf16.msra.mxu0 %v279
    %299 = vmatprep.subr.bf16.mxu0 0
    %300 = vmatpush1.bf16.msra.mxu0 0
    %301 = vmatprep.subr.bf16.mxu0 0
    %302 = vmatpush1.bf16.msra.mxu0 0
    %303 = vmatprep.subr.bf16.mxu0 0
    %304 = vmatpush1.bf16.msra.mxu0 0
    %305 = vmatprep.subr.bf16.mxu0 0
    %306 = vmatpush1.bf16.msra.mxu0 0
    %307 = vmatprep.subr.bf16.mxu0 0
    %308 = vmatpush1.bf16.msra.mxu0 0
    %309 = vmatprep.subr.bf16.mxu0 0
    %310 = vmatpush1.bf16.msra.mxu0 0
    %311 = vmatprep.subr.bf16.mxu0 0
    %312 = vmatpush1.bf16.msra.mxu0 0
    %313 = vmatprep.subr.bf16.mxu0 0
    %314 = vmatpush1.bf16.msra.mxu0 0
    %315 = vmatprep.subr.bf16.mxu0 0
    %316 = vmatpush1.bf16.msra.mxu0 0
    %317 = vmatprep.subr.bf16.mxu0 0
    %318 = vmatpush1.bf16.msra.mxu0 0
    %319 = vmatprep.subr.bf16.mxu0 0
    %320 = vmatpush1.bf16.msra.mxu0 0
    %321 = vmatprep.subr.bf16.mxu0 0
    %322 = vmatpush1.bf16.msra.mxu0 0
    %323 = vmatprep.subr.bf16.mxu0 0
    %324 = vmatpush1.bf16.msra.mxu0 0
    %325 = vmatprep.subr.bf16.mxu0 0
    %326 = vmatpush1.bf16.msra.mxu0 0
    %327 = vmatprep.mubr.bf16.mxu0 0
    %328 = vmatmul.mubr.bf16.gmra.mrb[0].mxu0 %v293
    %v329 = vpop.f32.mrb[0].mxu0
    %v330 = vadd.f32 %v204, %v329
    %v331 = vpop.f32.mrb[0].mxu0
    %v332 = vadd.f32 %v206, %v331
    %v333 = vpop.f32.mrb[0].mxu0
    %v334 = vpop.f32.mrb[0].mxu0
    %335 = vdwg.mxu0
    %336 = vmatprep.subr.bf16.mxu0 %v278
    %337 = vmatpush1.bf16.msra.mxu0 %v277
    %338 = vmatprep.subr.bf16.mxu0 %v282
    %339 = vmatpush1.bf16.msra.mxu0 %v281
    %340 = vmatprep.subr.bf16.mxu0 0
    %341 = vmatpush1.bf16.msra.mxu0 0
    %342 = vmatprep.subr.bf16.mxu0 0
    %343 = vmatpush1.bf16.msra.mxu0 0
    %344 = vmatprep.subr.bf16.mxu0 0
    %345 = vmatpush1.bf16.msra.mxu0 0
    %346 = vmatprep.subr.bf16.mxu0 0
    %347 = vmatpush1.bf16.msra.mxu0 0
    %348 = vmatprep.subr.bf16.mxu0 0
    %349 = vmatpush1.bf16.msra.mxu0 0
    %350 = vmatprep.subr.bf16.mxu0 0
    %351 = vmatpush1.bf16.msra.mxu0 0
    %352 = vmatprep.subr.bf16.mxu0 0
    %353 = vmatpush1.bf16.msra.mxu0 0
    %354 = vmatprep.subr.bf16.mxu0 0
    %355 = vmatpush1.bf16.msra.mxu0 0
    %356 = vmatprep.subr.bf16.mxu0 0
    %357 = vmatpush1.bf16.msra.mxu0 0
    %358 = vmatprep.subr.bf16.mxu0 0
    %359 = vmatpush1.bf16.msra.mxu0 0
    %360 = vmatprep.subr.bf16.mxu0 0
    %361 = vmatpush1.bf16.msra.mxu0 0
    %362 = vmatprep.subr.bf16.mxu0 0
    %363 = vmatpush1.bf16.msra.mxu0 0
    %364 = vmatprep.subr.bf16.mxu0 0
    %365 = vmatpush1.bf16.msra.mxu0 0
    %366 = vmatprep.subr.bf16.mxu0 0
    %367 = vmatpush1.bf16.msra.mxu0 0
    %368 = vmatprep.mubr.bf16.mxu0 0
    %369 = vmatmul.mubr.bf16.gmra.mrb[0].mxu0 %v293
    %v370 = vpop.f32.mrb[0].mxu0
    %v371 = vadd.f32 %v245, %v370
    %v372 = vpop.f32.mrb[0].mxu0
    %v373 = vadd.f32 %v247, %v372
    %v374 = vpop.f32.mrb[0].mxu0
    %v375 = vpop.f32.mrb[0].mxu0
    %376 = vdwg.mxu0
    %v377 = vld [vmem:[%s4] sm:$0xf]
    %v379 = vlaneseq
    %v380 = vshrl.u32 %v379, 7
    %v381 = vsub.s32 0, %v380
    %v382 = vrot.slane %v377, %v381
    %v383 = vlaneseq
    %v384 = vshrl.u32 %v383, 7
    %v385 = vsub.s32 1, %v384
    %v386 = vrot.slane %v377, %v385
    %v387 = vlaneseq
    %v388 = vshrl.u32 %v387, 7
    %v389 = vsub.s32 2, %v388
    %v390 = vrot.slane %v377, %v389
    %v391 = vlaneseq
    %v392 = vshrl.u32 %v391, 7
    %v393 = vsub.s32 3, %v392
    %v394 = vrot.slane %v377, %v393
    %v399 = vadd.f32 %v330, %v382
    %v400 = vadd.f32 %v332, %v386
    %v401 = vadd.f32 %v371, %v390
    %v402 = vadd.f32 %v373, %v394
    %v403 = vmax.f32 %v399, 0.0
    %v404 = vmax.f32 %v400, 0.0
    %v405 = vmax.f32 %v401, 0.0
    %v406 = vmax.f32 %v402, 0.0
    %v407 = vpack.c.bf16 %v403, %v403
    %v408 = vpack.c.bf16 %v404, %v404
    %v409 = vpack.c.bf16 %v405, %v405
    %v410 = vpack.c.bf16 %v406, %v406
    %v411 = vld [vmem:[#allocation10] sm:$0xff]
    %v412 = vld [vmem:[#allocation10 + $0x8] sm:$0xff]
    %v413 = vld [vmem:[#allocation10 + $0x10] sm:$0xff]
    %v414 = vld [vmem:[#allocation10 + $0x18] sm:$0xff]
    %v415 = vld [vmem:[#allocation10 + $0x20] sm:$0xff]
    %v416 = vld [vmem:[#allocation10 + $0x28] sm:$0xff]
    %v417 = vld [vmem:[#allocation10 + $0x30] sm:$0xff]
    %v418 = vld [vmem:[#allocation10 + $0x38] sm:$0xff]
    %v419 = vld [vmem:[#allocation10 + $0x40] sm:$0xff]
    %v420 = vld [vmem:[#allocation10 + $0x48] sm:$0xff]
    %v421 = vld [vmem:[#allocation10 + $0x50] sm:$0xff]
    %v422 = vld [vmem:[#allocation10 + $0x58] sm:$0xff]
    %v423 = vld [vmem:[#allocation10 + $0x60] sm:$0xff]
    %v424 = vld [vmem:[#allocation10 + $0x68] sm:$0xff]
    %v425 = vld [vmem:[#allocation10 + $0x70] sm:$0xff]
    %v426 = vld [vmem:[#allocation10 + $0x78] sm:$0xff]
    %v427 = vld [vmem:[#allocation10 + $0x80] sm:$0xff]
    %v428 = vld [vmem:[#allocation10 + $0x88] sm:$0xff]
    %v429 = vld [vmem:[#allocation10 + $0x90] sm:$0xff]
    %v430 = vld [vmem:[#allocation10 + $0x98] sm:$0xff]
    %v431 = vld [vmem:[#allocation10 + $0xa0] sm:$0xff]
    %v432 = vld [vmem:[#allocation10 + $0xa8] sm:$0xff]
    %v433 = vld [vmem:[#allocation10 + $0xb0] sm:$0xff]
    %v434 = vld [vmem:[#allocation10 + $0xb8] sm:$0xff]
    %v435 = vld [vmem:[#allocation10 + $0xc0] sm:$0xff]
    %v436 = vld [vmem:[#allocation10 + $0xc8] sm:$0xff]
    %v437 = vld [vmem:[#allocation10 + $0xd0] sm:$0xff]
    %v438 = vld [vmem:[#allocation10 + $0xd8] sm:$0xff]
    %v439 = vld [vmem:[#allocation10 + $0xe0] sm:$0xff]
    %v440 = vld [vmem:[#allocation10 + $0xe8] sm:$0xff]
    %v441 = vld [vmem:[#allocation10 + $0xf0] sm:$0xff]
    %v442 = vld [vmem:[#allocation10 + $0xf8] sm:$0xff]
    %v443 = vld [vmem:[#allocation10 + $0x100] sm:$0xff]
    %v444 = vld [vmem:[#allocation10 + $0x108] sm:$0xff]
    %v445 = vld [vmem:[#allocation10 + $0x110] sm:$0xff]
    %v446 = vld [vmem:[#allocation10 + $0x118] sm:$0xff]
    %v447 = vld [vmem:[#allocation10 + $0x120] sm:$0xff]
    %v448 = vld [vmem:[#allocation10 + $0x128] sm:$0xff]
    %v449 = vld [vmem:[#allocation10 + $0x130] sm:$0xff]
    %v450 = vld [vmem:[#allocation10 + $0x138] sm:$0xff]
    %v451 = vld [vmem:[#allocation10 + $0x140] sm:$0xff]
    %v452 = vld [vmem:[#allocation10 + $0x148] sm:$0xff]
    %v453 = vld [vmem:[#allocation10 + $0x150] sm:$0xff]
    %v454 = vld [vmem:[#allocation10 + $0x158] sm:$0xff]
    %v455 = vld [vmem:[#allocation10 + $0x160] sm:$0xff]
    %v456 = vld [vmem:[#allocation10 + $0x168] sm:$0xff]
    %v457 = vld [vmem:[#allocation10 + $0x170] sm:$0xff]
    %v458 = vld [vmem:[#allocation10 + $0x178] sm:$0xff]
    %v459 = vld [vmem:[#allocation10 + $0x180] sm:$0xff]
    %v460 = vld [vmem:[#allocation10 + $0x188] sm:$0xff]
    %v461 = vld [vmem:[#allocation10 + $0x190] sm:$0xff]
    %v462 = vld [vmem:[#allocation10 + $0x198] sm:$0xff]
    %v463 = vld [vmem:[#allocation10 + $0x1a0] sm:$0xff]
    %v464 = vld [vmem:[#allocation10 + $0x1a8] sm:$0xff]
    %v465 = vld [vmem:[#allocation10 + $0x1b0] sm:$0xff]
    %v466 = vld [vmem:[#allocation10 + $0x1b8] sm:$0xff]
    %v467 = vld [vmem:[#allocation10 + $0x1c0] sm:$0xff]
    %v468 = vld [vmem:[#allocation10 + $0x1c8] sm:$0xff]
    %v469 = vld [vmem:[#allocation10 + $0x1d0] sm:$0xff]
    %v470 = vld [vmem:[#allocation10 + $0x1d8] sm:$0xff]
    %v471 = vld [vmem:[#allocation10 + $0x1e0] sm:$0xff]
    %v472 = vld [vmem:[#allocation10 + $0x1e8] sm:$0xff]
    %v473 = vld [vmem:[#allocation10 + $0x1f0] sm:$0xff]
    %v474 = vld [vmem:[#allocation10 + $0x1f8] sm:$0xff]
    %v475 = vld [vmem:[#allocation10 + $0x200] sm:$0xff]
    %v476 = vld [vmem:[#allocation10 + $0x208] sm:$0xff]
    %v477 = vld [vmem:[#allocation10 + $0x210] sm:$0xff]
    %v478 = vld [vmem:[#allocation10 + $0x218] sm:$0xff]
    %v479 = vld [vmem:[#allocation10 + $0x220] sm:$0xff]
    %v480 = vld [vmem:[#allocation10 + $0x228] sm:$0xff]
    %v481 = vld [vmem:[#allocation10 + $0x230] sm:$0xff]
    %v482 = vld [vmem:[#allocation10 + $0x238] sm:$0xff]
    %v483 = vld [vmem:[#allocation10 + $0x240] sm:$0xff]
    %v484 = vld [vmem:[#allocation10 + $0x248] sm:$0xff]
    %v485 = vld [vmem:[#allocation10 + $0x250] sm:$0xff]
    %v486 = vld [vmem:[#allocation10 + $0x258] sm:$0xff]
    %v487 = vld [vmem:[#allocation10 + $0x260] sm:$0xff]
    %v488 = vld [vmem:[#allocation10 + $0x268] sm:$0xff]
    %v489 = vld [vmem:[#allocation10 + $0x270] sm:$0xff]
    %v490 = vld [vmem:[#allocation10 + $0x278] sm:$0xff]
    %v491 = vld [vmem:[#allocation10 + $0x280] sm:$0xff]
    %v492 = vld [vmem:[#allocation10 + $0x288] sm:$0xff]
    %v493 = vld [vmem:[#allocation10 + $0x290] sm:$0xff]
    %v494 = vld [vmem:[#allocation10 + $0x298] sm:$0xff]
    %v495 = vld [vmem:[#allocation10 + $0x2a0] sm:$0xff]
    %v496 = vld [vmem:[#allocation10 + $0x2a8] sm:$0xff]
    %v497 = vld [vmem:[#allocation10 + $0x2b0] sm:$0xff]
    %v498 = vld [vmem:[#allocation10 + $0x2b8] sm:$0xff]
    %v499 = vld [vmem:[#allocation10 + $0x2c0] sm:$0xff]
    %v500 = vld [vmem:[#allocation10 + $0x2c8] sm:$0xff]
    %v501 = vld [vmem:[#allocation10 + $0x2d0] sm:$0xff]
    %v502 = vld [vmem:[#allocation10 + $0x2d8] sm:$0xff]
    %v503 = vld [vmem:[#allocation10 + $0x2e0] sm:$0xff]
    %v504 = vld [vmem:[#allocation10 + $0x2e8] sm:$0xff]
    %v505 = vld [vmem:[#allocation10 + $0x2f0] sm:$0xff]
    %v506 = vld [vmem:[#allocation10 + $0x2f8] sm:$0xff]
    %v507 = vld [vmem:[#allocation10 + $0x300] sm:$0xff]
    %v508 = vld [vmem:[#allocation10 + $0x308] sm:$0xff]
    %v509 = vld [vmem:[#allocation10 + $0x310] sm:$0xff]
    %v510 = vld [vmem:[#allocation10 + $0x318] sm:$0xff]
    %v511 = vld [vmem:[#allocation10 + $0x320] sm:$0xff]
    %v512 = vld [vmem:[#allocation10 + $0x328] sm:$0xff]
    %v513 = vld [vmem:[#allocation10 + $0x330] sm:$0xff]
    %v514 = vld [vmem:[#allocation10 + $0x338] sm:$0xff]
    %v515 = vld [vmem:[#allocation10 + $0x340] sm:$0xff]
    %v516 = vld [vmem:[#allocation10 + $0x348] sm:$0xff]
    %v517 = vld [vmem:[#allocation10 + $0x350] sm:$0xff]
    %v518 = vld [vmem:[#allocation10 + $0x358] sm:$0xff]
    %v519 = vld [vmem:[#allocation10 + $0x360] sm:$0xff]
    %v520 = vld [vmem:[#allocation10 + $0x368] sm:$0xff]
    %v521 = vld [vmem:[#allocation10 + $0x370] sm:$0xff]
    %v522 = vld [vmem:[#allocation10 + $0x378] sm:$0xff]
    %v523 = vld [vmem:[#allocation10 + $0x380] sm:$0xff]
    %v524 = vld [vmem:[#allocation10 + $0x388] sm:$0xff]
    %v525 = vld [vmem:[#allocation10 + $0x390] sm:$0xff]
    %v526 = vld [vmem:[#allocation10 + $0x398] sm:$0xff]
    %v527 = vld [vmem:[#allocation10 + $0x3a0] sm:$0xff]
    %v528 = vld [vmem:[#allocation10 + $0x3a8] sm:$0xff]
    %v529 = vld [vmem:[#allocation10 + $0x3b0] sm:$0xff]
    %v530 = vld [vmem:[#allocation10 + $0x3b8] sm:$0xff]
    %v531 = vld [vmem:[#allocation10 + $0x3c0] sm:$0xff]
    %v532 = vld [vmem:[#allocation10 + $0x3c8] sm:$0xff]
    %v533 = vld [vmem:[#allocation10 + $0x3d0] sm:$0xff]
    %v534 = vld [vmem:[#allocation10 + $0x3d8] sm:$0xff]
    %v535 = vld [vmem:[#allocation10 + $0x3e0] sm:$0xff]
    %v536 = vld [vmem:[#allocation10 + $0x3e8] sm:$0xff]
    %v537 = vld [vmem:[#allocation10 + $0x3f0] sm:$0xff]
    %v538 = vld [vmem:[#allocation10 + $0x3f8] sm:$0xff]
    %v539 = vld [vmem:[%s6] sm:$0xf]
    %v541 = vlaneseq
    %v542 = vshrl.u32 %v541, 7
    %v543 = vsub.s32 0, %v542
    %v544 = vrot.slane %v539, %v543
    %v545 = vlaneseq
    %v546 = vshrl.u32 %v545, 7
    %v547 = vsub.s32 1, %v546
    %v548 = vrot.slane %v539, %v547
    %v549 = vlaneseq
    %v550 = vshrl.u32 %v549, 7
    %v551 = vsub.s32 2, %v550
    %v552 = vrot.slane %v539, %v551
    %v553 = vlaneseq
    %v554 = vshrl.u32 %v553, 7
    %v555 = vsub.s32 3, %v554
    %v556 = vrot.slane %v539, %v555
    %v689 = vunpack.c.l.b16 %v411
    %v690 = vunpack.c.h.b16 %v411
    %v691 = vunpack.c.l.b16 %v412
    %v692 = vunpack.c.h.b16 %v412
    %v693 = vunpack.c.l.b16 %v413
    %v694 = vunpack.c.h.b16 %v413
    %v695 = vunpack.c.l.b16 %v414
    %v696 = vunpack.c.h.b16 %v414
    %v697 = vunpack.c.l.b16 %v415
    %v698 = vunpack.c.h.b16 %v415
    %v699 = vunpack.c.l.b16 %v416
    %v700 = vunpack.c.h.b16 %v416
    %v701 = vunpack.c.l.b16 %v417
    %v702 = vunpack.c.h.b16 %v417
    %v703 = vunpack.c.l.b16 %v418
    %v704 = vunpack.c.h.b16 %v418
    %v705 = vunpack.c.l.b16 %v419
    %v706 = vunpack.c.h.b16 %v419
    %v707 = vunpack.c.l.b16 %v420
    %v708 = vunpack.c.h.b16 %v420
    %v709 = vunpack.c.l.b16 %v421
    %v710 = vunpack.c.h.b16 %v421
    %v711 = vunpack.c.l.b16 %v422
    %v712 = vunpack.c.h.b16 %v422
    %v713 = vunpack.c.l.b16 %v423
    %v714 = vunpack.c.h.b16 %v423
    %v715 = vunpack.c.l.b16 %v424
    %v716 = vunpack.c.h.b16 %v424
    %v717 = vunpack.c.l.b16 %v425
    %v718 = vunpack.c.h.b16 %v425
    %v719 = vunpack.c.l.b16 %v426
    %v720 = vunpack.c.h.b16 %v426
    %v721 = vunpack.c.l.b16 %v427
    %v722 = vunpack.c.h.b16 %v427
    %v723 = vunpack.c.l.b16 %v428
    %v724 = vunpack.c.h.b16 %v428
    %v725 = vunpack.c.l.b16 %v429
    %v726 = vunpack.c.h.b16 %v429
    %v727 = vunpack.c.l.b16 %v430
    %v728 = vunpack.c.h.b16 %v430
    %v729 = vunpack.c.l.b16 %v431
    %v730 = vunpack.c.h.b16 %v431
    %v731 = vunpack.c.l.b16 %v432
    %v732 = vunpack.c.h.b16 %v432
    %v733 = vunpack.c.l.b16 %v433
    %v734 = vunpack.c.h.b16 %v433
    %v735 = vunpack.c.l.b16 %v434
    %v736 = vunpack.c.h.b16 %v434
    %v737 = vunpack.c.l.b16 %v435
    %v738 = vunpack.c.h.b16 %v435
    %v739 = vunpack.c.l.b16 %v436
    %v740 = vunpack.c.h.b16 %v436
    %v741 = vunpack.c.l.b16 %v437
    %v742 = vunpack.c.h.b16 %v437
    %v743 = vunpack.c.l.b16 %v438
    %v744 = vunpack.c.h.b16 %v438
    %v745 = vunpack.c.l.b16 %v439
    %v746 = vunpack.c.h.b16 %v439
    %v747 = vunpack.c.l.b16 %v440
    %v748 = vunpack.c.h.b16 %v440
    %v749 = vunpack.c.l.b16 %v441
    %v750 = vunpack.c.h.b16 %v441
    %v751 = vunpack.c.l.b16 %v442
    %v752 = vunpack.c.h.b16 %v442
    %v753 = vunpack.c.l.b16 %v443
    %v754 = vunpack.c.h.b16 %v443
    %v755 = vunpack.c.l.b16 %v444
    %v756 = vunpack.c.h.b16 %v444
    %v757 = vunpack.c.l.b16 %v445
    %v758 = vunpack.c.h.b16 %v445
    %v759 = vunpack.c.l.b16 %v446
    %v760 = vunpack.c.h.b16 %v446
    %v761 = vunpack.c.l.b16 %v447
    %v762 = vunpack.c.h.b16 %v447
    %v763 = vunpack.c.l.b16 %v448
    %v764 = vunpack.c.h.b16 %v448
    %v765 = vunpack.c.l.b16 %v449
    %v766 = vunpack.c.h.b16 %v449
    %v767 = vunpack.c.l.b16 %v450
    %v768 = vunpack.c.h.b16 %v450
    %v769 = vunpack.c.l.b16 %v451
    %v770 = vunpack.c.h.b16 %v451
    %v771 = vunpack.c.l.b16 %v452
    %v772 = vunpack.c.h.b16 %v452
    %v773 = vunpack.c.l.b16 %v453
    %v774 = vunpack.c.h.b16 %v453
    %v775 = vunpack.c.l.b16 %v454
    %v776 = vunpack.c.h.b16 %v454
    %v777 = vunpack.c.l.b16 %v455
    %v778 = vunpack.c.h.b16 %v455
    %v779 = vunpack.c.l.b16 %v456
    %v780 = vunpack.c.h.b16 %v456
    %v781 = vunpack.c.l.b16 %v457
    %v782 = vunpack.c.h.b16 %v457
    %v783 = vunpack.c.l.b16 %v458
    %v784 = vunpack.c.h.b16 %v458
    %v785 = vunpack.c.l.b16 %v459
    %v786 = vunpack.c.h.b16 %v459
    %v787 = vunpack.c.l.b16 %v460
    %v788 = vunpack.c.h.b16 %v460
    %v789 = vunpack.c.l.b16 %v461
    %v790 = vunpack.c.h.b16 %v461
    %v791 = vunpack.c.l.b16 %v462
    %v792 = vunpack.c.h.b16 %v462
    %v793 = vunpack.c.l.b16 %v463
    %v794 = vunpack.c.h.b16 %v463
    %v795 = vunpack.c.l.b16 %v464
    %v796 = vunpack.c.h.b16 %v464
    %v797 = vunpack.c.l.b16 %v465
    %v798 = vunpack.c.h.b16 %v465
    %v799 = vunpack.c.l.b16 %v466
    %v800 = vunpack.c.h.b16 %v466
    %v801 = vunpack.c.l.b16 %v467
    %v802 = vunpack.c.h.b16 %v467
    %v803 = vunpack.c.l.b16 %v468
    %v804 = vunpack.c.h.b16 %v468
    %v805 = vunpack.c.l.b16 %v469
    %v806 = vunpack.c.h.b16 %v469
    %v807 = vunpack.c.l.b16 %v470
    %v808 = vunpack.c.h.b16 %v470
    %v809 = vunpack.c.l.b16 %v471
    %v810 = vunpack.c.h.b16 %v471
    %v811 = vunpack.c.l.b16 %v472
    %v812 = vunpack.c.h.b16 %v472
    %v813 = vunpack.c.l.b16 %v473
    %v814 = vunpack.c.h.b16 %v473
    %v815 = vunpack.c.l.b16 %v474
    %v816 = vunpack.c.h.b16 %v474
    %v817 = vunpack.c.l.b16 %v475
    %v818 = vunpack.c.h.b16 %v475
    %v819 = vunpack.c.l.b16 %v476
    %v820 = vunpack.c.h.b16 %v476
    %v821 = vunpack.c.l.b16 %v477
    %v822 = vunpack.c.h.b16 %v477
    %v823 = vunpack.c.l.b16 %v478
    %v824 = vunpack.c.h.b16 %v478
    %v825 = vunpack.c.l.b16 %v479
    %v826 = vunpack.c.h.b16 %v479
    %v827 = vunpack.c.l.b16 %v480
    %v828 = vunpack.c.h.b16 %v480
    %v829 = vunpack.c.l.b16 %v481
    %v830 = vunpack.c.h.b16 %v481
    %v831 = vunpack.c.l.b16 %v482
    %v832 = vunpack.c.h.b16 %v482
    %v833 = vunpack.c.l.b16 %v483
    %v834 = vunpack.c.h.b16 %v483
    %v835 = vunpack.c.l.b16 %v484
    %v836 = vunpack.c.h.b16 %v484
    %v837 = vunpack.c.l.b16 %v485
    %v838 = vunpack.c.h.b16 %v485
    %v839 = vunpack.c.l.b16 %v486
    %v840 = vunpack.c.h.b16 %v486
    %v841 = vunpack.c.l.b16 %v487
    %v842 = vunpack.c.h.b16 %v487
    %v843 = vunpack.c.l.b16 %v488
    %v844 = vunpack.c.h.b16 %v488
    %v845 = vunpack.c.l.b16 %v489
    %v846 = vunpack.c.h.b16 %v489
    %v847 = vunpack.c.l.b16 %v490
    %v848 = vunpack.c.h.b16 %v490
    %v849 = vunpack.c.l.b16 %v491
    %v850 = vunpack.c.h.b16 %v491
    %v851 = vunpack.c.l.b16 %v492
    %v852 = vunpack.c.h.b16 %v492
    %v853 = vunpack.c.l.b16 %v493
    %v854 = vunpack.c.h.b16 %v493
    %v855 = vunpack.c.l.b16 %v494
    %v856 = vunpack.c.h.b16 %v494
    %v857 = vunpack.c.l.b16 %v495
    %v858 = vunpack.c.h.b16 %v495
    %v859 = vunpack.c.l.b16 %v496
    %v860 = vunpack.c.h.b16 %v496
    %v861 = vunpack.c.l.b16 %v497
    %v862 = vunpack.c.h.b16 %v497
    %v863 = vunpack.c.l.b16 %v498
    %v864 = vunpack.c.h.b16 %v498
    %v865 = vunpack.c.l.b16 %v499
    %v866 = vunpack.c.h.b16 %v499
    %v867 = vunpack.c.l.b16 %v500
    %v868 = vunpack.c.h.b16 %v500
    %v869 = vunpack.c.l.b16 %v501
    %v870 = vunpack.c.h.b16 %v501
    %v871 = vunpack.c.l.b16 %v502
    %v872 = vunpack.c.h.b16 %v502
    %v873 = vunpack.c.l.b16 %v503
    %v874 = vunpack.c.h.b16 %v503
    %v875 = vunpack.c.l.b16 %v504
    %v876 = vunpack.c.h.b16 %v504
    %v877 = vunpack.c.l.b16 %v505
    %v878 = vunpack.c.h.b16 %v505
    %v879 = vunpack.c.l.b16 %v506
    %v880 = vunpack.c.h.b16 %v506
    %v881 = vunpack.c.l.b16 %v507
    %v882 = vunpack.c.h.b16 %v507
    %v883 = vunpack.c.l.b16 %v508
    %v884 = vunpack.c.h.b16 %v508
    %v885 = vunpack.c.l.b16 %v509
    %v886 = vunpack.c.h.b16 %v509
    %v887 = vunpack.c.l.b16 %v510
    %v888 = vunpack.c.h.b16 %v510
    %v889 = vunpack.c.l.b16 %v511
    %v890 = vunpack.c.h.b16 %v511
    %v891 = vunpack.c.l.b16 %v512
    %v892 = vunpack.c.h.b16 %v512
    %v893 = vunpack.c.l.b16 %v513
    %v894 = vunpack.c.h.b16 %v513
    %v895 = vunpack.c.l.b16 %v514
    %v896 = vunpack.c.h.b16 %v514
    %v897 = vunpack.c.l.b16 %v515
    %v898 = vunpack.c.h.b16 %v515
    %v899 = vunpack.c.l.b16 %v516
    %v900 = vunpack.c.h.b16 %v516
    %v901 = vunpack.c.l.b16 %v517
    %v902 = vunpack.c.h.b16 %v517
    %v903 = vunpack.c.l.b16 %v518
    %v904 = vunpack.c.h.b16 %v518
    %v905 = vunpack.c.l.b16 %v519
    %v906 = vunpack.c.h.b16 %v519
    %v907 = vunpack.c.l.b16 %v520
    %v908 = vunpack.c.h.b16 %v520
    %v909 = vunpack.c.l.b16 %v521
    %v910 = vunpack.c.h.b16 %v521
    %v911 = vunpack.c.l.b16 %v522
    %v912 = vunpack.c.h.b16 %v522
    %v913 = vunpack.c.l.b16 %v523
    %v914 = vunpack.c.h.b16 %v523
    %v915 = vunpack.c.l.b16 %v524
    %v916 = vunpack.c.h.b16 %v524
    %v917 = vunpack.c.l.b16 %v525
    %v918 = vunpack.c.h.b16 %v525
    %v919 = vunpack.c.l.b16 %v526
    %v920 = vunpack.c.h.b16 %v526
    %v921 = vunpack.c.l.b16 %v527
    %v922 = vunpack.c.h.b16 %v527
    %v923 = vunpack.c.l.b16 %v528
    %v924 = vunpack.c.h.b16 %v528
    %v925 = vunpack.c.l.b16 %v529
    %v926 = vunpack.c.h.b16 %v529
    %v927 = vunpack.c.l.b16 %v530
    %v928 = vunpack.c.h.b16 %v530
    %v929 = vunpack.c.l.b16 %v531
    %v930 = vunpack.c.h.b16 %v531
    %v931 = vunpack.c.l.b16 %v532
    %v932 = vunpack.c.h.b16 %v532
    %v933 = vunpack.c.l.b16 %v533
    %v934 = vunpack.c.h.b16 %v533
    %v935 = vunpack.c.l.b16 %v534
    %v936 = vunpack.c.h.b16 %v534
    %v937 = vunpack.c.l.b16 %v535
    %v938 = vunpack.c.h.b16 %v535
    %v939 = vunpack.c.l.b16 %v536
    %v940 = vunpack.c.h.b16 %v536
    %v941 = vunpack.c.l.b16 %v537
    %v942 = vunpack.c.h.b16 %v537
    %v943 = vunpack.c.l.b16 %v538
    %v944 = vunpack.c.h.b16 %v538
    %v945 = vpack.c.b16 %v693, %v689
    %v946 = vpack.c.b16 %v694, %v690
    %v947 = vpack.c.b16 %v695, %v691
    %v948 = vpack.c.b16 %v696, %v692
    %v949 = vpack.c.b16 %v701, %v697
    %v950 = vpack.c.b16 %v702, %v698
    %v951 = vpack.c.b16 %v703, %v699
    %v952 = vpack.c.b16 %v704, %v700
    %v953 = vpack.c.b16 %v709, %v705
    %v954 = vpack.c.b16 %v710, %v706
    %v955 = vpack.c.b16 %v711, %v707
    %v956 = vpack.c.b16 %v712, %v708
    %v957 = vpack.c.b16 %v717, %v713
    %v958 = vpack.c.b16 %v718, %v714
    %v959 = vpack.c.b16 %v719, %v715
    %v960 = vpack.c.b16 %v720, %v716
    %v961 = vpack.c.b16 %v725, %v721
    %v962 = vpack.c.b16 %v726, %v722
    %v963 = vpack.c.b16 %v727, %v723
    %v964 = vpack.c.b16 %v728, %v724
    %v965 = vpack.c.b16 %v733, %v729
    %v966 = vpack.c.b16 %v734, %v730
    %v967 = vpack.c.b16 %v735, %v731
    %v968 = vpack.c.b16 %v736, %v732
    %v969 = vpack.c.b16 %v741, %v737
    %v970 = vpack.c.b16 %v742, %v738
    %v971 = vpack.c.b16 %v743, %v739
    %v972 = vpack.c.b16 %v744, %v740
    %v973 = vpack.c.b16 %v749, %v745
    %v974 = vpack.c.b16 %v750, %v746
    %v975 = vpack.c.b16 %v751, %v747
    %v976 = vpack.c.b16 %v752, %v748
    %v977 = vpack.c.b16 %v757, %v753
    %v978 = vpack.c.b16 %v758, %v754
    %v979 = vpack.c.b16 %v759, %v755
    %v980 = vpack.c.b16 %v760, %v756
    %v981 = vpack.c.b16 %v765, %v761
    %v982 = vpack.c.b16 %v766, %v762
    %v983 = vpack.c.b16 %v767, %v763
    %v984 = vpack.c.b16 %v768, %v764
    %v985 = vpack.c.b16 %v773, %v769
    %v986 = vpack.c.b16 %v774, %v770
    %v987 = vpack.c.b16 %v775, %v771
    %v988 = vpack.c.b16 %v776, %v772
    %v989 = vpack.c.b16 %v781, %v777
    %v990 = vpack.c.b16 %v782, %v778
    %v991 = vpack.c.b16 %v783, %v779
    %v992 = vpack.c.b16 %v784, %v780
    %v993 = vpack.c.b16 %v789, %v785
    %v994 = vpack.c.b16 %v790, %v786
    %v995 = vpack.c.b16 %v791, %v787
    %v996 = vpack.c.b16 %v792, %v788
    %v997 = vpack.c.b16 %v797, %v793
    %v998 = vpack.c.b16 %v798, %v794
    %v999 = vpack.c.b16 %v799, %v795
    %v1000 = vpack.c.b16 %v800, %v796
    %v1001 = vpack.c.b16 %v805, %v801
    %v1002 = vpack.c.b16 %v806, %v802
    %v1003 = vpack.c.b16 %v807, %v803
    %v1004 = vpack.c.b16 %v808, %v804
    %v1005 = vpack.c.b16 %v813, %v809
    %v1006 = vpack.c.b16 %v814, %v810
    %v1007 = vpack.c.b16 %v815, %v811
    %v1008 = vpack.c.b16 %v816, %v812
    %v1009 = vpack.c.b16 %v821, %v817
    %v1010 = vpack.c.b16 %v822, %v818
    %v1011 = vpack.c.b16 %v823, %v819
    %v1012 = vpack.c.b16 %v824, %v820
    %v1013 = vpack.c.b16 %v829, %v825
    %v1014 = vpack.c.b16 %v830, %v826
    %v1015 = vpack.c.b16 %v831, %v827
    %v1016 = vpack.c.b16 %v832, %v828
    %v1017 = vpack.c.b16 %v837, %v833
    %v1018 = vpack.c.b16 %v838, %v834
    %v1019 = vpack.c.b16 %v839, %v835
    %v1020 = vpack.c.b16 %v840, %v836
    %v1021 = vpack.c.b16 %v845, %v841
    %v1022 = vpack.c.b16 %v846, %v842
    %v1023 = vpack.c.b16 %v847, %v843
    %v1024 = vpack.c.b16 %v848, %v844
    %v1025 = vpack.c.b16 %v853, %v849
    %v1026 = vpack.c.b16 %v854, %v850
    %v1027 = vpack.c.b16 %v855, %v851
    %v1028 = vpack.c.b16 %v856, %v852
    %v1029 = vpack.c.b16 %v861, %v857
    %v1030 = vpack.c.b16 %v862, %v858
    %v1031 = vpack.c.b16 %v863, %v859
    %v1032 = vpack.c.b16 %v864, %v860
    %v1033 = vpack.c.b16 %v869, %v865
    %v1034 = vpack.c.b16 %v870, %v866
    %v1035 = vpack.c.b16 %v871, %v867
    %v1036 = vpack.c.b16 %v872, %v868
    %v1037 = vpack.c.b16 %v877, %v873
    %v1038 = vpack.c.b16 %v878, %v874
    %v1039 = vpack.c.b16 %v879, %v875
    %v1040 = vpack.c.b16 %v880, %v876
    %v1041 = vpack.c.b16 %v885, %v881
    %v1042 = vpack.c.b16 %v886, %v882
    %v1043 = vpack.c.b16 %v887, %v883
    %v1044 = vpack.c.b16 %v888, %v884
    %v1045 = vpack.c.b16 %v893, %v889
    %v1046 = vpack.c.b16 %v894, %v890
    %v1047 = vpack.c.b16 %v895, %v891
    %v1048 = vpack.c.b16 %v896, %v892
    %v1049 = vpack.c.b16 %v901, %v897
    %v1050 = vpack.c.b16 %v902, %v898
    %v1051 = vpack.c.b16 %v903, %v899
    %v1052 = vpack.c.b16 %v904, %v900
    %v1053 = vpack.c.b16 %v909, %v905
    %v1054 = vpack.c.b16 %v910, %v906
    %v1055 = vpack.c.b16 %v911, %v907
    %v1056 = vpack.c.b16 %v912, %v908
    %v1057 = vpack.c.b16 %v917, %v913
    %v1058 = vpack.c.b16 %v918, %v914
    %v1059 = vpack.c.b16 %v919, %v915
    %v1060 = vpack.c.b16 %v920, %v916
    %v1061 = vpack.c.b16 %v925, %v921
    %v1062 = vpack.c.b16 %v926, %v922
    %v1063 = vpack.c.b16 %v927, %v923
    %v1064 = vpack.c.b16 %v928, %v924
    %v1065 = vpack.c.b16 %v933, %v929
    %v1066 = vpack.c.b16 %v934, %v930
    %v1067 = vpack.c.b16 %v935, %v931
    %v1068 = vpack.c.b16 %v936, %v932
    %v1069 = vpack.c.b16 %v941, %v937
    %v1070 = vpack.c.b16 %v942, %v938
    %v1071 = vpack.c.b16 %v943, %v939
    %v1072 = vpack.c.b16 %v944, %v940
    %1201 = vmatprep.subr.bf16.mxu0 %v946
    %1202 = vmatpush1.bf16.msra.mxu0 %v945
    %1203 = vmatprep.subr.bf16.mxu0 %v950
    %1204 = vmatpush1.bf16.msra.mxu0 %v949
    %1205 = vmatprep.subr.bf16.mxu0 %v954
    %1206 = vmatpush1.bf16.msra.mxu0 %v953
    %1207 = vmatprep.subr.bf16.mxu0 %v958
    %1208 = vmatpush1.bf16.msra.mxu0 %v957
    %1209 = vmatprep.subr.bf16.mxu0 %v962
    %1210 = vmatpush1.bf16.msra.mxu0 %v961
    %1211 = vmatprep.subr.bf16.mxu0 %v966
    %1212 = vmatpush1.bf16.msra.mxu0 %v965
    %1213 = vmatprep.subr.bf16.mxu0 %v970
    %1214 = vmatpush1.bf16.msra.mxu0 %v969
    %1215 = vmatprep.subr.bf16.mxu0 %v974
    %1216 = vmatpush1.bf16.msra.mxu0 %v973
    %1217 = vmatprep.subr.bf16.mxu0 %v978
    %1218 = vmatpush1.bf16.msra.mxu0 %v977
    %1219 = vmatprep.subr.bf16.mxu0 %v982
    %1220 = vmatpush1.bf16.msra.mxu0 %v981
    %1221 = vmatprep.subr.bf16.mxu0 %v986
    %1222 = vmatpush1.bf16.msra.mxu0 %v985
    %1223 = vmatprep.subr.bf16.mxu0 %v990
    %1224 = vmatpush1.bf16.msra.mxu0 %v989
    %1225 = vmatprep.subr.bf16.mxu0 %v994
    %1226 = vmatpush1.bf16.msra.mxu0 %v993
    %1227 = vmatprep.subr.bf16.mxu0 %v998
    %1228 = vmatpush1.bf16.msra.mxu0 %v997
    %1229 = vmatprep.subr.bf16.mxu0 %v1002
    %1230 = vmatpush1.bf16.msra.mxu0 %v1001
    %1231 = vmatprep.subr.bf16.mxu0 %v1006
    %1232 = vmatpush1.bf16.msra.mxu0 %v1005
    %1233 = vmatprep.mubr.bf16.mxu0 %v408
    %1234 = vmatmul.mubr.bf16.gmra.mrb[0].mxu0 %v407
    %v1235 = vpop.f32.mrb[0].mxu0
    %v1236 = vadd.f32 %v544, %v1235
    %v1237 = vpop.f32.mrb[0].mxu0
    %v1238 = vadd.f32 %v548, %v1237
    %v1239 = vpop.f32.mrb[0].mxu0
    %v1240 = vpop.f32.mrb[0].mxu0
    %1241 = vdwg.mxu0
    %1242 = vmatprep.subr.bf16.mxu0 %v1010
    %1243 = vmatpush1.bf16.msra.mxu0 %v1009
    %1244 = vmatprep.subr.bf16.mxu0 %v1014
    %1245 = vmatpush1.bf16.msra.mxu0 %v1013
    %1246 = vmatprep.subr.bf16.mxu0 %v1018
    %1247 = vmatpush1.bf16.msra.mxu0 %v1017
    %1248 = vmatprep.subr.bf16.mxu0 %v1022
    %1249 = vmatpush1.bf16.msra.mxu0 %v1021
    %1250 = vmatprep.subr.bf16.mxu0 %v1026
    %1251 = vmatpush1.bf16.msra.mxu0 %v1025
    %1252 = vmatprep.subr.bf16.mxu0 %v1030
    %1253 = vmatpush1.bf16.msra.mxu0 %v1029
    %1254 = vmatprep.subr.bf16.mxu0 %v1034
    %1255 = vmatpush1.bf16.msra.mxu0 %v1033
    %1256 = vmatprep.subr.bf16.mxu0 %v1038
    %1257 = vmatpush1.bf16.msra.mxu0 %v1037
    %1258 = vmatprep.subr.bf16.mxu0 %v1042
    %1259 = vmatpush1.bf16.msra.mxu0 %v1041
    %1260 = vmatprep.subr.bf16.mxu0 %v1046
    %1261 = vmatpush1.bf16.msra.mxu0 %v1045
    %1262 = vmatprep.subr.bf16.mxu0 %v1050
    %1263 = vmatpush1.bf16.msra.mxu0 %v1049
    %1264 = vmatprep.subr.bf16.mxu0 %v1054
    %1265 = vmatpush1.bf16.msra.mxu0 %v1053
    %1266 = vmatprep.subr.bf16.mxu0 %v1058
    %1267 = vmatpush1.bf16.msra.mxu0 %v1057
    %1268 = vmatprep.subr.bf16.mxu0 %v1062
    %1269 = vmatpush1.bf16.msra.mxu0 %v1061
    %1270 = vmatprep.subr.bf16.mxu0 %v1066
    %1271 = vmatpush1.bf16.msra.mxu0 %v1065
    %1272 = vmatprep.subr.bf16.mxu0 %v1070
    %1273 = vmatpush1.bf16.msra.mxu0 %v1069
    %1274 = vmatprep.mubr.bf16.mxu0 %v410
    %1275 = vmatmul.mubr.bf16.gmra.mrb[0].mxu0 %v409
    %v1276 = vpop.f32.mrb[0].mxu0
    %v1277 = vadd.f32 %v1236, %v1276
    %v1278 = vpop.f32.mrb[0].mxu0
    %v1279 = vadd.f32 %v1238, %v1278
    %v1280 = vpop.f32.mrb[0].mxu0
    %v1281 = vpop.f32.mrb[0].mxu0
    %1282 = vdwg.mxu0
    %1283 = vmatprep.subr.bf16.mxu0 %v948
    %1284 = vmatpush1.bf16.msra.mxu0 %v947
    %1285 = vmatprep.subr.bf16.mxu0 %v952
    %1286 = vmatpush1.bf16.msra.mxu0 %v951
    %1287 = vmatprep.subr.bf16.mxu0 %v956
    %1288 = vmatpush1.bf16.msra.mxu0 %v955
    %1289 = vmatprep.subr.bf16.mxu0 %v960
    %1290 = vmatpush1.bf16.msra.mxu0 %v959
    %1291 = vmatprep.subr.bf16.mxu0 %v964
    %1292 = vmatpush1.bf16.msra.mxu0 %v963
    %1293 = vmatprep.subr.bf16.mxu0 %v968
    %1294 = vmatpush1.bf16.msra.mxu0 %v967
    %1295 = vmatprep.subr.bf16.mxu0 %v972
    %1296 = vmatpush1.bf16.msra.mxu0 %v971
    %1297 = vmatprep.subr.bf16.mxu0 %v976
    %1298 = vmatpush1.bf16.msra.mxu0 %v975
    %1299 = vmatprep.subr.bf16.mxu0 %v980
    %1300 = vmatpush1.bf16.msra.mxu0 %v979
    %1301 = vmatprep.subr.bf16.mxu0 %v984
    %1302 = vmatpush1.bf16.msra.mxu0 %v983
    %1303 = vmatprep.subr.bf16.mxu0 %v988
    %1304 = vmatpush1.bf16.msra.mxu0 %v987
    %1305 = vmatprep.subr.bf16.mxu0 %v992
    %1306 = vmatpush1.bf16.msra.mxu0 %v991
    %1307 = vmatprep.subr.bf16.mxu0 %v996
    %1308 = vmatpush1.bf16.msra.mxu0 %v995
    %1309 = vmatprep.subr.bf16.mxu0 %v1000
    %1310 = vmatpush1.bf16.msra.mxu0 %v999
    %1311 = vmatprep.subr.bf16.mxu0 %v1004
    %1312 = vmatpush1.bf16.msra.mxu0 %v1003
    %1313 = vmatprep.subr.bf16.mxu0 %v1008
    %1314 = vmatpush1.bf16.msra.mxu0 %v1007
    %1315 = vmatprep.mubr.bf16.mxu0 %v408
    %1316 = vmatmul.mubr.bf16.gmra.mrb[0].mxu0 %v407
    %v1317 = vpop.f32.mrb[0].mxu0
    %v1318 = vadd.f32 %v552, %v1317
    %v1319 = vpop.f32.mrb[0].mxu0
    %v1320 = vadd.f32 %v556, %v1319
    %v1321 = vpop.f32.mrb[0].mxu0
    %v1322 = vpop.f32.mrb[0].mxu0
    %1323 = vdwg.mxu0
    %1324 = vmatprep.subr.bf16.mxu0 %v1012
    %1325 = vmatpush1.bf16.msra.mxu0 %v1011
    %1326 = vmatprep.subr.bf16.mxu0 %v1016
    %1327 = vmatpush1.bf16.msra.mxu0 %v1015
    %1328 = vmatprep.subr.bf16.mxu0 %v1020
    %1329 = vmatpush1.bf16.msra.mxu0 %v1019
    %1330 = vmatprep.subr.bf16.mxu0 %v1024
    %1331 = vmatpush1.bf16.msra.mxu0 %v1023
    %1332 = vmatprep.subr.bf16.mxu0 %v1028
    %1333 = vmatpush1.bf16.msra.mxu0 %v1027
    %1334 = vmatprep.subr.bf16.mxu0 %v1032
    %1335 = vmatpush1.bf16.msra.mxu0 %v1031
    %1336 = vmatprep.subr.bf16.mxu0 %v1036
    %1337 = vmatpush1.bf16.msra.mxu0 %v1035
    %1338 = vmatprep.subr.bf16.mxu0 %v1040
    %1339 = vmatpush1.bf16.msra.mxu0 %v1039
    %1340 = vmatprep.subr.bf16.mxu0 %v1044
    %1341 = vmatpush1.bf16.msra.mxu0 %v1043
    %1342 = vmatprep.subr.bf16.mxu0 %v1048
    %1343 = vmatpush1.bf16.msra.mxu0 %v1047
    %1344 = vmatprep.subr.bf16.mxu0 %v1052
    %1345 = vmatpush1.bf16.msra.mxu0 %v1051
    %1346 = vmatprep.subr.bf16.mxu0 %v1056
    %1347 = vmatpush1.bf16.msra.mxu0 %v1055
    %1348 = vmatprep.subr.bf16.mxu0 %v1060
    %1349 = vmatpush1.bf16.msra.mxu0 %v1059
    %1350 = vmatprep.subr.bf16.mxu0 %v1064
    %1351 = vmatpush1.bf16.msra.mxu0 %v1063
    %1352 = vmatprep.subr.bf16.mxu0 %v1068
    %1353 = vmatpush1.bf16.msra.mxu0 %v1067
    %1354 = vmatprep.subr.bf16.mxu0 %v1072
    %1355 = vmatpush1.bf16.msra.mxu0 %v1071
    %1356 = vmatprep.mubr.bf16.mxu0 %v410
    %1357 = vmatmul.mubr.bf16.gmra.mrb[0].mxu0 %v409
    %v1358 = vpop.f32.mrb[0].mxu0
    %v1359 = vadd.f32 %v1318, %v1358
    %v1360 = vpop.f32.mrb[0].mxu0
    %v1361 = vadd.f32 %v1320, %v1360
    %v1362 = vpop.f32.mrb[0].mxu0
    %v1363 = vpop.f32.mrb[0].mxu0
    %1364 = vdwg.mxu0
    %v1365 = vmax.f32 %v1277, 0.0
    %v1366 = vmax.f32 %v1279, 0.0
    %v1367 = vmax.f32 %v1359, 0.0
    %v1368 = vmax.f32 %v1361, 0.0
    %v1369 = vpack.c.bf16 %v1365, %v1365
    %v1370 = vpack.c.bf16 %v1366, %v1366
    %v1371 = vpack.c.bf16 %v1367, %v1367
    %v1372 = vpack.c.bf16 %v1368, %v1368
    %v1373 = vld [vmem:[#allocation11] sm:$0xff]
    %v1374 = vld [vmem:[#allocation11 + $0x8] sm:$0xff]
    %v1375 = vld [vmem:[#allocation11 + $0x10] sm:$0xff]
    %v1376 = vld [vmem:[#allocation11 + $0x18] sm:$0xff]
    %v1377 = vld [vmem:[#allocation11 + $0x20] sm:$0xff]
    %v1378 = vld [vmem:[#allocation11 + $0x28] sm:$0xff]
    %v1379 = vld [vmem:[#allocation11 + $0x30] sm:$0xff]
    %v1380 = vld [vmem:[#allocation11 + $0x38] sm:$0xff]
    %v1381 = vld [vmem:[#allocation11 + $0x40] sm:$0xff]
    %v1382 = vld [vmem:[#allocation11 + $0x48] sm:$0xff]
    %v1383 = vld [vmem:[#allocation11 + $0x50] sm:$0xff]
    %v1384 = vld [vmem:[#allocation11 + $0x58] sm:$0xff]
    %v1385 = vld [vmem:[#allocation11 + $0x60] sm:$0xff]
    %v1386 = vld [vmem:[#allocation11 + $0x68] sm:$0xff]
    %v1387 = vld [vmem:[#allocation11 + $0x70] sm:$0xff]
    %v1388 = vld [vmem:[#allocation11 + $0x78] sm:$0xff]
    %v1389 = vld [vmem:[#allocation11 + $0x80] sm:$0xff]
    %v1390 = vld [vmem:[#allocation11 + $0x88] sm:$0xff]
    %v1391 = vld [vmem:[#allocation11 + $0x90] sm:$0xff]
    %v1392 = vld [vmem:[#allocation11 + $0x98] sm:$0xff]
    %v1393 = vld [vmem:[#allocation11 + $0xa0] sm:$0xff]
    %v1394 = vld [vmem:[#allocation11 + $0xa8] sm:$0xff]
    %v1395 = vld [vmem:[#allocation11 + $0xb0] sm:$0xff]
    %v1396 = vld [vmem:[#allocation11 + $0xb8] sm:$0xff]
    %v1397 = vld [vmem:[#allocation11 + $0xc0] sm:$0xff]
    %v1398 = vld [vmem:[#allocation11 + $0xc8] sm:$0xff]
    %v1399 = vld [vmem:[#allocation11 + $0xd0] sm:$0xff]
    %v1400 = vld [vmem:[#allocation11 + $0xd8] sm:$0xff]
    %v1401 = vld [vmem:[#allocation11 + $0xe0] sm:$0xff]
    %v1402 = vld [vmem:[#allocation11 + $0xe8] sm:$0xff]
    %v1403 = vld [vmem:[#allocation11 + $0xf0] sm:$0xff]
    %v1404 = vld [vmem:[#allocation11 + $0xf8] sm:$0xff]
    %v1405 = vld [vmem:[#allocation11 + $0x100] sm:$0xff]
    %v1406 = vld [vmem:[#allocation11 + $0x108] sm:$0xff]
    %v1407 = vld [vmem:[#allocation11 + $0x110] sm:$0xff]
    %v1408 = vld [vmem:[#allocation11 + $0x118] sm:$0xff]
    %v1409 = vld [vmem:[#allocation11 + $0x120] sm:$0xff]
    %v1410 = vld [vmem:[#allocation11 + $0x128] sm:$0xff]
    %v1411 = vld [vmem:[#allocation11 + $0x130] sm:$0xff]
    %v1412 = vld [vmem:[#allocation11 + $0x138] sm:$0xff]
    %v1413 = vld [vmem:[#allocation11 + $0x140] sm:$0xff]
    %v1414 = vld [vmem:[#allocation11 + $0x148] sm:$0xff]
    %v1415 = vld [vmem:[#allocation11 + $0x150] sm:$0xff]
    %v1416 = vld [vmem:[#allocation11 + $0x158] sm:$0xff]
    %v1417 = vld [vmem:[#allocation11 + $0x160] sm:$0xff]
    %v1418 = vld [vmem:[#allocation11 + $0x168] sm:$0xff]
    %v1419 = vld [vmem:[#allocation11 + $0x170] sm:$0xff]
    %v1420 = vld [vmem:[#allocation11 + $0x178] sm:$0xff]
    %v1421 = vld [vmem:[#allocation11 + $0x180] sm:$0xff]
    %v1422 = vld [vmem:[#allocation11 + $0x188] sm:$0xff]
    %v1423 = vld [vmem:[#allocation11 + $0x190] sm:$0xff]
    %v1424 = vld [vmem:[#allocation11 + $0x198] sm:$0xff]
    %v1425 = vld [vmem:[#allocation11 + $0x1a0] sm:$0xff]
    %v1426 = vld [vmem:[#allocation11 + $0x1a8] sm:$0xff]
    %v1427 = vld [vmem:[#allocation11 + $0x1b0] sm:$0xff]
    %v1428 = vld [vmem:[#allocation11 + $0x1b8] sm:$0xff]
    %v1429 = vld [vmem:[#allocation11 + $0x1c0] sm:$0xff]
    %v1430 = vld [vmem:[#allocation11 + $0x1c8] sm:$0xff]
    %v1431 = vld [vmem:[#allocation11 + $0x1d0] sm:$0xff]
    %v1432 = vld [vmem:[#allocation11 + $0x1d8] sm:$0xff]
    %v1433 = vld [vmem:[#allocation11 + $0x1e0] sm:$0xff]
    %v1434 = vld [vmem:[#allocation11 + $0x1e8] sm:$0xff]
    %v1435 = vld [vmem:[#allocation11 + $0x1f0] sm:$0xff]
    %v1436 = vld [vmem:[#allocation11 + $0x1f8] sm:$0xff]
    %v1437 = vld [vmem:[#allocation11 + $0x200] sm:$0xff]
    %v1438 = vld [vmem:[#allocation11 + $0x208] sm:$0xff]
    %v1439 = vld [vmem:[#allocation11 + $0x210] sm:$0xff]
    %v1440 = vld [vmem:[#allocation11 + $0x218] sm:$0xff]
    %v1441 = vld [vmem:[#allocation11 + $0x220] sm:$0xff]
    %v1442 = vld [vmem:[#allocation11 + $0x228] sm:$0xff]
    %v1443 = vld [vmem:[#allocation11 + $0x230] sm:$0xff]
    %v1444 = vld [vmem:[#allocation11 + $0x238] sm:$0xff]
    %v1445 = vld [vmem:[#allocation11 + $0x240] sm:$0xff]
    %v1446 = vld [vmem:[#allocation11 + $0x248] sm:$0xff]
    %v1447 = vld [vmem:[#allocation11 + $0x250] sm:$0xff]
    %v1448 = vld [vmem:[#allocation11 + $0x258] sm:$0xff]
    %v1449 = vld [vmem:[#allocation11 + $0x260] sm:$0xff]
    %v1450 = vld [vmem:[#allocation11 + $0x268] sm:$0xff]
    %v1451 = vld [vmem:[#allocation11 + $0x270] sm:$0xff]
    %v1452 = vld [vmem:[#allocation11 + $0x278] sm:$0xff]
    %v1453 = vld [vmem:[#allocation11 + $0x280] sm:$0xff]
    %v1454 = vld [vmem:[#allocation11 + $0x288] sm:$0xff]
    %v1455 = vld [vmem:[#allocation11 + $0x290] sm:$0xff]
    %v1456 = vld [vmem:[#allocation11 + $0x298] sm:$0xff]
    %v1457 = vld [vmem:[#allocation11 + $0x2a0] sm:$0xff]
    %v1458 = vld [vmem:[#allocation11 + $0x2a8] sm:$0xff]
    %v1459 = vld [vmem:[#allocation11 + $0x2b0] sm:$0xff]
    %v1460 = vld [vmem:[#allocation11 + $0x2b8] sm:$0xff]
    %v1461 = vld [vmem:[#allocation11 + $0x2c0] sm:$0xff]
    %v1462 = vld [vmem:[#allocation11 + $0x2c8] sm:$0xff]
    %v1463 = vld [vmem:[#allocation11 + $0x2d0] sm:$0xff]
    %v1464 = vld [vmem:[#allocation11 + $0x2d8] sm:$0xff]
    %v1465 = vld [vmem:[#allocation11 + $0x2e0] sm:$0xff]
    %v1466 = vld [vmem:[#allocation11 + $0x2e8] sm:$0xff]
    %v1467 = vld [vmem:[#allocation11 + $0x2f0] sm:$0xff]
    %v1468 = vld [vmem:[#allocation11 + $0x2f8] sm:$0xff]
    %v1469 = vld [vmem:[#allocation11 + $0x300] sm:$0xff]
    %v1470 = vld [vmem:[#allocation11 + $0x308] sm:$0xff]
    %v1471 = vld [vmem:[#allocation11 + $0x310] sm:$0xff]
    %v1472 = vld [vmem:[#allocation11 + $0x318] sm:$0xff]
    %v1473 = vld [vmem:[#allocation11 + $0x320] sm:$0xff]
    %v1474 = vld [vmem:[#allocation11 + $0x328] sm:$0xff]
    %v1475 = vld [vmem:[#allocation11 + $0x330] sm:$0xff]
    %v1476 = vld [vmem:[#allocation11 + $0x338] sm:$0xff]
    %v1477 = vld [vmem:[#allocation11 + $0x340] sm:$0xff]
    %v1478 = vld [vmem:[#allocation11 + $0x348] sm:$0xff]
    %v1479 = vld [vmem:[#allocation11 + $0x350] sm:$0xff]
    %v1480 = vld [vmem:[#allocation11 + $0x358] sm:$0xff]
    %v1481 = vld [vmem:[#allocation11 + $0x360] sm:$0xff]
    %v1482 = vld [vmem:[#allocation11 + $0x368] sm:$0xff]
    %v1483 = vld [vmem:[#allocation11 + $0x370] sm:$0xff]
    %v1484 = vld [vmem:[#allocation11 + $0x378] sm:$0xff]
    %v1485 = vld [vmem:[#allocation11 + $0x380] sm:$0xff]
    %v1486 = vld [vmem:[#allocation11 + $0x388] sm:$0xff]
    %v1487 = vld [vmem:[#allocation11 + $0x390] sm:$0xff]
    %v1488 = vld [vmem:[#allocation11 + $0x398] sm:$0xff]
    %v1489 = vld [vmem:[#allocation11 + $0x3a0] sm:$0xff]
    %v1490 = vld [vmem:[#allocation11 + $0x3a8] sm:$0xff]
    %v1491 = vld [vmem:[#allocation11 + $0x3b0] sm:$0xff]
    %v1492 = vld [vmem:[#allocation11 + $0x3b8] sm:$0xff]
    %v1493 = vld [vmem:[#allocation11 + $0x3c0] sm:$0xff]
    %v1494 = vld [vmem:[#allocation11 + $0x3c8] sm:$0xff]
    %v1495 = vld [vmem:[#allocation11 + $0x3d0] sm:$0xff]
    %v1496 = vld [vmem:[#allocation11 + $0x3d8] sm:$0xff]
    %v1497 = vld [vmem:[#allocation11 + $0x3e0] sm:$0xff]
    %v1498 = vld [vmem:[#allocation11 + $0x3e8] sm:$0xff]
    %v1499 = vld [vmem:[#allocation11 + $0x3f0] sm:$0xff]
    %v1500 = vld [vmem:[#allocation11 + $0x3f8] sm:$0xff]
    %v1501 = vld [vmem:[%s8] sm:$0xf]
    %v1503 = vlaneseq
    %v1504 = vshrl.u32 %v1503, 7
    %v1505 = vsub.s32 0, %v1504
    %v1506 = vrot.slane %v1501, %v1505
    %v1507 = vlaneseq
    %v1508 = vshrl.u32 %v1507, 7
    %v1509 = vsub.s32 1, %v1508
    %v1510 = vrot.slane %v1501, %v1509
    %v1511 = vlaneseq
    %v1512 = vshrl.u32 %v1511, 7
    %v1513 = vsub.s32 2, %v1512
    %v1514 = vrot.slane %v1501, %v1513
    %v1515 = vlaneseq
    %v1516 = vshrl.u32 %v1515, 7
    %v1517 = vsub.s32 3, %v1516
    %v1518 = vrot.slane %v1501, %v1517
    %v1651 = vunpack.c.l.b16 %v1373
    %v1652 = vunpack.c.h.b16 %v1373
    %v1653 = vunpack.c.l.b16 %v1374
    %v1654 = vunpack.c.h.b16 %v1374
    %v1655 = vunpack.c.l.b16 %v1375
    %v1656 = vunpack.c.h.b16 %v1375
    %v1657 = vunpack.c.l.b16 %v1376
    %v1658 = vunpack.c.h.b16 %v1376
    %v1659 = vunpack.c.l.b16 %v1377
    %v1660 = vunpack.c.h.b16 %v1377
    %v1661 = vunpack.c.l.b16 %v1378
    %v1662 = vunpack.c.h.b16 %v1378
    %v1663 = vunpack.c.l.b16 %v1379
    %v1664 = vunpack.c.h.b16 %v1379
    %v1665 = vunpack.c.l.b16 %v1380
    %v1666 = vunpack.c.h.b16 %v1380
    %v1667 = vunpack.c.l.b16 %v1381
    %v1668 = vunpack.c.h.b16 %v1381
    %v1669 = vunpack.c.l.b16 %v1382
    %v1670 = vunpack.c.h.b16 %v1382
    %v1671 = vunpack.c.l.b16 %v1383
    %v1672 = vunpack.c.h.b16 %v1383
    %v1673 = vunpack.c.l.b16 %v1384
    %v1674 = vunpack.c.h.b16 %v1384
    %v1675 = vunpack.c.l.b16 %v1385
    %v1676 = vunpack.c.h.b16 %v1385
    %v1677 = vunpack.c.l.b16 %v1386
    %v1678 = vunpack.c.h.b16 %v1386
    %v1679 = vunpack.c.l.b16 %v1387
    %v1680 = vunpack.c.h.b16 %v1387
    %v1681 = vunpack.c.l.b16 %v1388
    %v1682 = vunpack.c.h.b16 %v1388
    %v1683 = vunpack.c.l.b16 %v1389
    %v1684 = vunpack.c.h.b16 %v1389
    %v1685 = vunpack.c.l.b16 %v1390
    %v1686 = vunpack.c.h.b16 %v1390
    %v1687 = vunpack.c.l.b16 %v1391
    %v1688 = vunpack.c.h.b16 %v1391
    %v1689 = vunpack.c.l.b16 %v1392
    %v1690 = vunpack.c.h.b16 %v1392
    %v1691 = vunpack.c.l.b16 %v1393
    %v1692 = vunpack.c.h.b16 %v1393
    %v1693 = vunpack.c.l.b16 %v1394
    %v1694 = vunpack.c.h.b16 %v1394
    %v1695 = vunpack.c.l.b16 %v1395
    %v1696 = vunpack.c.h.b16 %v1395
    %v1697 = vunpack.c.l.b16 %v1396
    %v1698 = vunpack.c.h.b16 %v1396
    %v1699 = vunpack.c.l.b16 %v1397
    %v1700 = vunpack.c.h.b16 %v1397
    %v1701 = vunpack.c.l.b16 %v1398
    %v1702 = vunpack.c.h.b16 %v1398
    %v1703 = vunpack.c.l.b16 %v1399
    %v1704 = vunpack.c.h.b16 %v1399
    %v1705 = vunpack.c.l.b16 %v1400
    %v1706 = vunpack.c.h.b16 %v1400
    %v1707 = vunpack.c.l.b16 %v1401
    %v1708 = vunpack.c.h.b16 %v1401
    %v1709 = vunpack.c.l.b16 %v1402
    %v1710 = vunpack.c.h.b16 %v1402
    %v1711 = vunpack.c.l.b16 %v1403
    %v1712 = vunpack.c.h.b16 %v1403
    %v1713 = vunpack.c.l.b16 %v1404
    %v1714 = vunpack.c.h.b16 %v1404
    %v1715 = vunpack.c.l.b16 %v1405
    %v1716 = vunpack.c.h.b16 %v1405
    %v1717 = vunpack.c.l.b16 %v1406
    %v1718 = vunpack.c.h.b16 %v1406
    %v1719 = vunpack.c.l.b16 %v1407
    %v1720 = vunpack.c.h.b16 %v1407
    %v1721 = vunpack.c.l.b16 %v1408
    %v1722 = vunpack.c.h.b16 %v1408
    %v1723 = vunpack.c.l.b16 %v1409
    %v1724 = vunpack.c.h.b16 %v1409
    %v1725 = vunpack.c.l.b16 %v1410
    %v1726 = vunpack.c.h.b16 %v1410
    %v1727 = vunpack.c.l.b16 %v1411
    %v1728 = vunpack.c.h.b16 %v1411
    %v1729 = vunpack.c.l.b16 %v1412
    %v1730 = vunpack.c.h.b16 %v1412
    %v1731 = vunpack.c.l.b16 %v1413
    %v1732 = vunpack.c.h.b16 %v1413
    %v1733 = vunpack.c.l.b16 %v1414
    %v1734 = vunpack.c.h.b16 %v1414
    %v1735 = vunpack.c.l.b16 %v1415
    %v1736 = vunpack.c.h.b16 %v1415
    %v1737 = vunpack.c.l.b16 %v1416
    %v1738 = vunpack.c.h.b16 %v1416
    %v1739 = vunpack.c.l.b16 %v1417
    %v1740 = vunpack.c.h.b16 %v1417
    %v1741 = vunpack.c.l.b16 %v1418
    %v1742 = vunpack.c.h.b16 %v1418
    %v1743 = vunpack.c.l.b16 %v1419
    %v1744 = vunpack.c.h.b16 %v1419
    %v1745 = vunpack.c.l.b16 %v1420
    %v1746 = vunpack.c.h.b16 %v1420
    %v1747 = vunpack.c.l.b16 %v1421
    %v1748 = vunpack.c.h.b16 %v1421
    %v1749 = vunpack.c.l.b16 %v1422
    %v1750 = vunpack.c.h.b16 %v1422
    %v1751 = vunpack.c.l.b16 %v1423
    %v1752 = vunpack.c.h.b16 %v1423
    %v1753 = vunpack.c.l.b16 %v1424
    %v1754 = vunpack.c.h.b16 %v1424
    %v1755 = vunpack.c.l.b16 %v1425
    %v1756 = vunpack.c.h.b16 %v1425
    %v1757 = vunpack.c.l.b16 %v1426
    %v1758 = vunpack.c.h.b16 %v1426
    %v1759 = vunpack.c.l.b16 %v1427
    %v1760 = vunpack.c.h.b16 %v1427
    %v1761 = vunpack.c.l.b16 %v1428
    %v1762 = vunpack.c.h.b16 %v1428
    %v1763 = vunpack.c.l.b16 %v1429
    %v1764 = vunpack.c.h.b16 %v1429
    %v1765 = vunpack.c.l.b16 %v1430
    %v1766 = vunpack.c.h.b16 %v1430
    %v1767 = vunpack.c.l.b16 %v1431
    %v1768 = vunpack.c.h.b16 %v1431
    %v1769 = vunpack.c.l.b16 %v1432
    %v1770 = vunpack.c.h.b16 %v1432
    %v1771 = vunpack.c.l.b16 %v1433
    %v1772 = vunpack.c.h.b16 %v1433
    %v1773 = vunpack.c.l.b16 %v1434
    %v1774 = vunpack.c.h.b16 %v1434
    %v1775 = vunpack.c.l.b16 %v1435
    %v1776 = vunpack.c.h.b16 %v1435
    %v1777 = vunpack.c.l.b16 %v1436
    %v1778 = vunpack.c.h.b16 %v1436
    %v1779 = vunpack.c.l.b16 %v1437
    %v1780 = vunpack.c.h.b16 %v1437
    %v1781 = vunpack.c.l.b16 %v1438
    %v1782 = vunpack.c.h.b16 %v1438
    %v1783 = vunpack.c.l.b16 %v1439
    %v1784 = vunpack.c.h.b16 %v1439
    %v1785 = vunpack.c.l.b16 %v1440
    %v1786 = vunpack.c.h.b16 %v1440
    %v1787 = vunpack.c.l.b16 %v1441
    %v1788 = vunpack.c.h.b16 %v1441
    %v1789 = vunpack.c.l.b16 %v1442
    %v1790 = vunpack.c.h.b16 %v1442
    %v1791 = vunpack.c.l.b16 %v1443
    %v1792 = vunpack.c.h.b16 %v1443
    %v1793 = vunpack.c.l.b16 %v1444
    %v1794 = vunpack.c.h.b16 %v1444
    %v1795 = vunpack.c.l.b16 %v1445
    %v1796 = vunpack.c.h.b16 %v1445
    %v1797 = vunpack.c.l.b16 %v1446
    %v1798 = vunpack.c.h.b16 %v1446
    %v1799 = vunpack.c.l.b16 %v1447
    %v1800 = vunpack.c.h.b16 %v1447
    %v1801 = vunpack.c.l.b16 %v1448
    %v1802 = vunpack.c.h.b16 %v1448
    %v1803 = vunpack.c.l.b16 %v1449
    %v1804 = vunpack.c.h.b16 %v1449
    %v1805 = vunpack.c.l.b16 %v1450
    %v1806 = vunpack.c.h.b16 %v1450
    %v1807 = vunpack.c.l.b16 %v1451
    %v1808 = vunpack.c.h.b16 %v1451
    %v1809 = vunpack.c.l.b16 %v1452
    %v1810 = vunpack.c.h.b16 %v1452
    %v1811 = vunpack.c.l.b16 %v1453
    %v1812 = vunpack.c.h.b16 %v1453
    %v1813 = vunpack.c.l.b16 %v1454
    %v1814 = vunpack.c.h.b16 %v1454
    %v1815 = vunpack.c.l.b16 %v1455
    %v1816 = vunpack.c.h.b16 %v1455
    %v1817 = vunpack.c.l.b16 %v1456
    %v1818 = vunpack.c.h.b16 %v1456
    %v1819 = vunpack.c.l.b16 %v1457
    %v1820 = vunpack.c.h.b16 %v1457
    %v1821 = vunpack.c.l.b16 %v1458
    %v1822 = vunpack.c.h.b16 %v1458
    %v1823 = vunpack.c.l.b16 %v1459
    %v1824 = vunpack.c.h.b16 %v1459
    %v1825 = vunpack.c.l.b16 %v1460
    %v1826 = vunpack.c.h.b16 %v1460
    %v1827 = vunpack.c.l.b16 %v1461
    %v1828 = vunpack.c.h.b16 %v1461
    %v1829 = vunpack.c.l.b16 %v1462
    %v1830 = vunpack.c.h.b16 %v1462
    %v1831 = vunpack.c.l.b16 %v1463
    %v1832 = vunpack.c.h.b16 %v1463
    %v1833 = vunpack.c.l.b16 %v1464
    %v1834 = vunpack.c.h.b16 %v1464
    %v1835 = vunpack.c.l.b16 %v1465
    %v1836 = vunpack.c.h.b16 %v1465
    %v1837 = vunpack.c.l.b16 %v1466
    %v1838 = vunpack.c.h.b16 %v1466
    %v1839 = vunpack.c.l.b16 %v1467
    %v1840 = vunpack.c.h.b16 %v1467
    %v1841 = vunpack.c.l.b16 %v1468
    %v1842 = vunpack.c.h.b16 %v1468
    %v1843 = vunpack.c.l.b16 %v1469
    %v1844 = vunpack.c.h.b16 %v1469
    %v1845 = vunpack.c.l.b16 %v1470
    %v1846 = vunpack.c.h.b16 %v1470
    %v1847 = vunpack.c.l.b16 %v1471
    %v1848 = vunpack.c.h.b16 %v1471
    %v1849 = vunpack.c.l.b16 %v1472
    %v1850 = vunpack.c.h.b16 %v1472
    %v1851 = vunpack.c.l.b16 %v1473
    %v1852 = vunpack.c.h.b16 %v1473
    %v1853 = vunpack.c.l.b16 %v1474
    %v1854 = vunpack.c.h.b16 %v1474
    %v1855 = vunpack.c.l.b16 %v1475
    %v1856 = vunpack.c.h.b16 %v1475
    %v1857 = vunpack.c.l.b16 %v1476
    %v1858 = vunpack.c.h.b16 %v1476
    %v1859 = vunpack.c.l.b16 %v1477
    %v1860 = vunpack.c.h.b16 %v1477
    %v1861 = vunpack.c.l.b16 %v1478
    %v1862 = vunpack.c.h.b16 %v1478
    %v1863 = vunpack.c.l.b16 %v1479
    %v1864 = vunpack.c.h.b16 %v1479
    %v1865 = vunpack.c.l.b16 %v1480
    %v1866 = vunpack.c.h.b16 %v1480
    %v1867 = vunpack.c.l.b16 %v1481
    %v1868 = vunpack.c.h.b16 %v1481
    %v1869 = vunpack.c.l.b16 %v1482
    %v1870 = vunpack.c.h.b16 %v1482
    %v1871 = vunpack.c.l.b16 %v1483
    %v1872 = vunpack.c.h.b16 %v1483
    %v1873 = vunpack.c.l.b16 %v1484
    %v1874 = vunpack.c.h.b16 %v1484
    %v1875 = vunpack.c.l.b16 %v1485
    %v1876 = vunpack.c.h.b16 %v1485
    %v1877 = vunpack.c.l.b16 %v1486
    %v1878 = vunpack.c.h.b16 %v1486
    %v1879 = vunpack.c.l.b16 %v1487
    %v1880 = vunpack.c.h.b16 %v1487
    %v1881 = vunpack.c.l.b16 %v1488
    %v1882 = vunpack.c.h.b16 %v1488
    %v1883 = vunpack.c.l.b16 %v1489
    %v1884 = vunpack.c.h.b16 %v1489
    %v1885 = vunpack.c.l.b16 %v1490
    %v1886 = vunpack.c.h.b16 %v1490
    %v1887 = vunpack.c.l.b16 %v1491
    %v1888 = vunpack.c.h.b16 %v1491
    %v1889 = vunpack.c.l.b16 %v1492
    %v1890 = vunpack.c.h.b16 %v1492
    %v1891 = vunpack.c.l.b16 %v1493
    %v1892 = vunpack.c.h.b16 %v1493
    %v1893 = vunpack.c.l.b16 %v1494
    %v1894 = vunpack.c.h.b16 %v1494
    %v1895 = vunpack.c.l.b16 %v1495
    %v1896 = vunpack.c.h.b16 %v1495
    %v1897 = vunpack.c.l.b16 %v1496
    %v1898 = vunpack.c.h.b16 %v1496
    %v1899 = vunpack.c.l.b16 %v1497
    %v1900 = vunpack.c.h.b16 %v1497
    %v1901 = vunpack.c.l.b16 %v1498
    %v1902 = vunpack.c.h.b16 %v1498
    %v1903 = vunpack.c.l.b16 %v1499
    %v1904 = vunpack.c.h.b16 %v1499
    %v1905 = vunpack.c.l.b16 %v1500
    %v1906 = vunpack.c.h.b16 %v1500
    %v1907 = vpack.c.b16 %v1655, %v1651
    %v1908 = vpack.c.b16 %v1656, %v1652
    %v1909 = vpack.c.b16 %v1657, %v1653
    %v1910 = vpack.c.b16 %v1658, %v1654
    %v1911 = vpack.c.b16 %v1663, %v1659
    %v1912 = vpack.c.b16 %v1664, %v1660
    %v1913 = vpack.c.b16 %v1665, %v1661
    %v1914 = vpack.c.b16 %v1666, %v1662
    %v1915 = vpack.c.b16 %v1671, %v1667
    %v1916 = vpack.c.b16 %v1672, %v1668
    %v1917 = vpack.c.b16 %v1673, %v1669
    %v1918 = vpack.c.b16 %v1674, %v1670
    %v1919 = vpack.c.b16 %v1679, %v1675
    %v1920 = vpack.c.b16 %v1680, %v1676
    %v1921 = vpack.c.b16 %v1681, %v1677
    %v1922 = vpack.c.b16 %v1682, %v1678
    %v1923 = vpack.c.b16 %v1687, %v1683
    %v1924 = vpack.c.b16 %v1688, %v1684
    %v1925 = vpack.c.b16 %v1689, %v1685
    %v1926 = vpack.c.b16 %v1690, %v1686
    %v1927 = vpack.c.b16 %v1695, %v1691
    %v1928 = vpack.c.b16 %v1696, %v1692
    %v1929 = vpack.c.b16 %v1697, %v1693
    %v1930 = vpack.c.b16 %v1698, %v1694
    %v1931 = vpack.c.b16 %v1703, %v1699
    %v1932 = vpack.c.b16 %v1704, %v1700
    %v1933 = vpack.c.b16 %v1705, %v1701
    %v1934 = vpack.c.b16 %v1706, %v1702
    %v1935 = vpack.c.b16 %v1711, %v1707
    %v1936 = vpack.c.b16 %v1712, %v1708
    %v1937 = vpack.c.b16 %v1713, %v1709
    %v1938 = vpack.c.b16 %v1714, %v1710
    %v1939 = vpack.c.b16 %v1719, %v1715
    %v1940 = vpack.c.b16 %v1720, %v1716
    %v1941 = vpack.c.b16 %v1721, %v1717
    %v1942 = vpack.c.b16 %v1722, %v1718
    %v1943 = vpack.c.b16 %v1727, %v1723
    %v1944 = vpack.c.b16 %v1728, %v1724
    %v1945 = vpack.c.b16 %v1729, %v1725
    %v1946 = vpack.c.b16 %v1730, %v1726
    %v1947 = vpack.c.b16 %v1735, %v1731
    %v1948 = vpack.c.b16 %v1736, %v1732
    %v1949 = vpack.c.b16 %v1737, %v1733
    %v1950 = vpack.c.b16 %v1738, %v1734
    %v1951 = vpack.c.b16 %v1743, %v1739
    %v1952 = vpack.c.b16 %v1744, %v1740
    %v1953 = vpack.c.b16 %v1745, %v1741
    %v1954 = vpack.c.b16 %v1746, %v1742
    %v1955 = vpack.c.b16 %v1751, %v1747
    %v1956 = vpack.c.b16 %v1752, %v1748
    %v1957 = vpack.c.b16 %v1753, %v1749
    %v1958 = vpack.c.b16 %v1754, %v1750
    %v1959 = vpack.c.b16 %v1759, %v1755
    %v1960 = vpack.c.b16 %v1760, %v1756
    %v1961 = vpack.c.b16 %v1761, %v1757
    %v1962 = vpack.c.b16 %v1762, %v1758
    %v1963 = vpack.c.b16 %v1767, %v1763
    %v1964 = vpack.c.b16 %v1768, %v1764
    %v1965 = vpack.c.b16 %v1769, %v1765
    %v1966 = vpack.c.b16 %v1770, %v1766
    %v1967 = vpack.c.b16 %v1775, %v1771
    %v1968 = vpack.c.b16 %v1776, %v1772
    %v1969 = vpack.c.b16 %v1777, %v1773
    %v1970 = vpack.c.b16 %v1778, %v1774
    %v1971 = vpack.c.b16 %v1783, %v1779
    %v1972 = vpack.c.b16 %v1784, %v1780
    %v1973 = vpack.c.b16 %v1785, %v1781
    %v1974 = vpack.c.b16 %v1786, %v1782
    %v1975 = vpack.c.b16 %v1791, %v1787
    %v1976 = vpack.c.b16 %v1792, %v1788
    %v1977 = vpack.c.b16 %v1793, %v1789
    %v1978 = vpack.c.b16 %v1794, %v1790
    %v1979 = vpack.c.b16 %v1799, %v1795
    %v1980 = vpack.c.b16 %v1800, %v1796
    %v1981 = vpack.c.b16 %v1801, %v1797
    %v1982 = vpack.c.b16 %v1802, %v1798
    %v1983 = vpack.c.b16 %v1807, %v1803
    %v1984 = vpack.c.b16 %v1808, %v1804
    %v1985 = vpack.c.b16 %v1809, %v1805
    %v1986 = vpack.c.b16 %v1810, %v1806
    %v1987 = vpack.c.b16 %v1815, %v1811
    %v1988 = vpack.c.b16 %v1816, %v1812
    %v1989 = vpack.c.b16 %v1817, %v1813
    %v1990 = vpack.c.b16 %v1818, %v1814
    %v1991 = vpack.c.b16 %v1823, %v1819
    %v1992 = vpack.c.b16 %v1824, %v1820
    %v1993 = vpack.c.b16 %v1825, %v1821
    %v1994 = vpack.c.b16 %v1826, %v1822
    %v1995 = vpack.c.b16 %v1831, %v1827
    %v1996 = vpack.c.b16 %v1832, %v1828
    %v1997 = vpack.c.b16 %v1833, %v1829
    %v1998 = vpack.c.b16 %v1834, %v1830
    %v1999 = vpack.c.b16 %v1839, %v1835
    %v2000 = vpack.c.b16 %v1840, %v1836
    %v2001 = vpack.c.b16 %v1841, %v1837
    %v2002 = vpack.c.b16 %v1842, %v1838
    %v2003 = vpack.c.b16 %v1847, %v1843
    %v2004 = vpack.c.b16 %v1848, %v1844
    %v2005 = vpack.c.b16 %v1849, %v1845
    %v2006 = vpack.c.b16 %v1850, %v1846
    %v2007 = vpack.c.b16 %v1855, %v1851
    %v2008 = vpack.c.b16 %v1856, %v1852
    %v2009 = vpack.c.b16 %v1857, %v1853
    %v2010 = vpack.c.b16 %v1858, %v1854
    %v2011 = vpack.c.b16 %v1863, %v1859
    %v2012 = vpack.c.b16 %v1864, %v1860
    %v2013 = vpack.c.b16 %v1865, %v1861
    %v2014 = vpack.c.b16 %v1866, %v1862
    %v2015 = vpack.c.b16 %v1871, %v1867
    %v2016 = vpack.c.b16 %v1872, %v1868
    %v2017 = vpack.c.b16 %v1873, %v1869
    %v2018 = vpack.c.b16 %v1874, %v1870
    %v2019 = vpack.c.b16 %v1879, %v1875
    %v2020 = vpack.c.b16 %v1880, %v1876
    %v2021 = vpack.c.b16 %v1881, %v1877
    %v2022 = vpack.c.b16 %v1882, %v1878
    %v2023 = vpack.c.b16 %v1887, %v1883
    %v2024 = vpack.c.b16 %v1888, %v1884
    %v2025 = vpack.c.b16 %v1889, %v1885
    %v2026 = vpack.c.b16 %v1890, %v1886
    %v2027 = vpack.c.b16 %v1895, %v1891
    %v2028 = vpack.c.b16 %v1896, %v1892
    %v2029 = vpack.c.b16 %v1897, %v1893
    %v2030 = vpack.c.b16 %v1898, %v1894
    %v2031 = vpack.c.b16 %v1903, %v1899
    %v2032 = vpack.c.b16 %v1904, %v1900
    %v2033 = vpack.c.b16 %v1905, %v1901
    %v2034 = vpack.c.b16 %v1906, %v1902
    %2163 = vmatprep.subr.bf16.mxu0 %v1908
    %2164 = vmatpush1.bf16.msra.mxu0 %v1907
    %2165 = vmatprep.subr.bf16.mxu0 %v1912
    %2166 = vmatpush1.bf16.msra.mxu0 %v1911
    %2167 = vmatprep.subr.bf16.mxu0 %v1916
    %2168 = vmatpush1.bf16.msra.mxu0 %v1915
    %2169 = vmatprep.subr.bf16.mxu0 %v1920
    %2170 = vmatpush1.bf16.msra.mxu0 %v1919
    %2171 = vmatprep.subr.bf16.mxu0 %v1924
    %2172 = vmatpush1.bf16.msra.mxu0 %v1923
    %2173 = vmatprep.subr.bf16.mxu0 %v1928
    %2174 = vmatpush1.bf16.msra.mxu0 %v1927
    %2175 = vmatprep.subr.bf16.mxu0 %v1932
    %2176 = vmatpush1.bf16.msra.mxu0 %v1931
    %2177 = vmatprep.subr.bf16.mxu0 %v1936
    %2178 = vmatpush1.bf16.msra.mxu0 %v1935
    %2179 = vmatprep.subr.bf16.mxu0 %v1940
    %2180 = vmatpush1.bf16.msra.mxu0 %v1939
    %2181 = vmatprep.subr.bf16.mxu0 %v1944
    %2182 = vmatpush1.bf16.msra.mxu0 %v1943
    %2183 = vmatprep.subr.bf16.mxu0 %v1948
    %2184 = vmatpush1.bf16.msra.mxu0 %v1947
    %2185 = vmatprep.subr.bf16.mxu0 %v1952
    %2186 = vmatpush1.bf16.msra.mxu0 %v1951
    %2187 = vmatprep.subr.bf16.mxu0 %v1956
    %2188 = vmatpush1.bf16.msra.mxu0 %v1955
    %2189 = vmatprep.subr.bf16.mxu0 %v1960
    %2190 = vmatpush1.bf16.msra.mxu0 %v1959
    %2191 = vmatprep.subr.bf16.mxu0 %v1964
    %2192 = vmatpush1.bf16.msra.mxu0 %v1963
    %2193 = vmatprep.subr.bf16.mxu0 %v1968
    %2194 = vmatpush1.bf16.msra.mxu0 %v1967
    %2195 = vmatprep.mubr.bf16.mxu0 %v1370
    %2196 = vmatmul.mubr.bf16.gmra.mrb[0].mxu0 %v1369
    %v2197 = vpop.f32.mrb[0].mxu0
    %v2198 = vadd.f32 %v1506, %v2197
    %v2199 = vpop.f32.mrb[0].mxu0
    %v2200 = vadd.f32 %v1510, %v2199
    %v2201 = vpop.f32.mrb[0].mxu0
    %v2202 = vpop.f32.mrb[0].mxu0
    %2203 = vdwg.mxu0
    %2204 = vmatprep.subr.bf16.mxu0 %v1972
    %2205 = vmatpush1.bf16.msra.mxu0 %v1971
    %2206 = vmatprep.subr.bf16.mxu0 %v1976
    %2207 = vmatpush1.bf16.msra.mxu0 %v1975
    %2208 = vmatprep.subr.bf16.mxu0 %v1980
    %2209 = vmatpush1.bf16.msra.mxu0 %v1979
    %2210 = vmatprep.subr.bf16.mxu0 %v1984
    %2211 = vmatpush1.bf16.msra.mxu0 %v1983
    %2212 = vmatprep.subr.bf16.mxu0 %v1988
    %2213 = vmatpush1.bf16.msra.mxu0 %v1987
    %2214 = vmatprep.subr.bf16.mxu0 %v1992
    %2215 = vmatpush1.bf16.msra.mxu0 %v1991
    %2216 = vmatprep.subr.bf16.mxu0 %v1996
    %2217 = vmatpush1.bf16.msra.mxu0 %v1995
    %2218 = vmatprep.subr.bf16.mxu0 %v2000
    %2219 = vmatpush1.bf16.msra.mxu0 %v1999
    %2220 = vmatprep.subr.bf16.mxu0 %v2004
    %2221 = vmatpush1.bf16.msra.mxu0 %v2003
    %2222 = vmatprep.subr.bf16.mxu0 %v2008
    %2223 = vmatpush1.bf16.msra.mxu0 %v2007
    %2224 = vmatprep.subr.bf16.mxu0 %v2012
    %2225 = vmatpush1.bf16.msra.mxu0 %v2011
    %2226 = vmatprep.subr.bf16.mxu0 %v2016
    %2227 = vmatpush1.bf16.msra.mxu0 %v2015
    %2228 = vmatprep.subr.bf16.mxu0 %v2020
    %2229 = vmatpush1.bf16.msra.mxu0 %v2019
    %2230 = vmatprep.subr.bf16.mxu0 %v2024
    %2231 = vmatpush1.bf16.msra.mxu0 %v2023
    %2232 = vmatprep.subr.bf16.mxu0 %v2028
    %2233 = vmatpush1.bf16.msra.mxu0 %v2027
    %2234 = vmatprep.subr.bf16.mxu0 %v2032
    %2235 = vmatpush1.bf16.msra.mxu0 %v2031
    %2236 = vmatprep.mubr.bf16.mxu0 %v1372
    %2237 = vmatmul.mubr.bf16.gmra.mrb[0].mxu0 %v1371
    %v2238 = vpop.f32.mrb[0].mxu0
    %v2239 = vadd.f32 %v2198, %v2238
    %v2240 = vpop.f32.mrb[0].mxu0
    %v2241 = vadd.f32 %v2200, %v2240
    %v2242 = vpop.f32.mrb[0].mxu0
    %v2243 = vpop.f32.mrb[0].mxu0
    %2244 = vdwg.mxu0
    %2245 = vmatprep.subr.bf16.mxu0 %v1910
    %2246 = vmatpush1.bf16.msra.mxu0 %v1909
    %2247 = vmatprep.subr.bf16.mxu0 %v1914
    %2248 = vmatpush1.bf16.msra.mxu0 %v1913
    %2249 = vmatprep.subr.bf16.mxu0 %v1918
    %2250 = vmatpush1.bf16.msra.mxu0 %v1917
    %2251 = vmatprep.subr.bf16.mxu0 %v1922
    %2252 = vmatpush1.bf16.msra.mxu0 %v1921
    %2253 = vmatprep.subr.bf16.mxu0 %v1926
    %2254 = vmatpush1.bf16.msra.mxu0 %v1925
    %2255 = vmatprep.subr.bf16.mxu0 %v1930
    %2256 = vmatpush1.bf16.msra.mxu0 %v1929
    %2257 = vmatprep.subr.bf16.mxu0 %v1934
    %2258 = vmatpush1.bf16.msra.mxu0 %v1933
    %2259 = vmatprep.subr.bf16.mxu0 %v1938
    %2260 = vmatpush1.bf16.msra.mxu0 %v1937
    %2261 = vmatprep.subr.bf16.mxu0 %v1942
    %2262 = vmatpush1.bf16.msra.mxu0 %v1941
    %2263 = vmatprep.subr.bf16.mxu0 %v1946
    %2264 = vmatpush1.bf16.msra.mxu0 %v1945
    %2265 = vmatprep.subr.bf16.mxu0 %v1950
    %2266 = vmatpush1.bf16.msra.mxu0 %v1949
    %2267 = vmatprep.subr.bf16.mxu0 %v1954
    %2268 = vmatpush1.bf16.msra.mxu0 %v1953
    %2269 = vmatprep.subr.bf16.mxu0 %v1958
    %2270 = vmatpush1.bf16.msra.mxu0 %v1957
    %2271 = vmatprep.subr.bf16.mxu0 %v1962
    %2272 = vmatpush1.bf16.msra.mxu0 %v1961
    %2273 = vmatprep.subr.bf16.mxu0 %v1966
    %2274 = vmatpush1.bf16.msra.mxu0 %v1965
    %2275 = vmatprep.subr.bf16.mxu0 %v1970
    %2276 = vmatpush1.bf16.msra.mxu0 %v1969
    %2277 = vmatprep.mubr.bf16.mxu0 %v1370
    %2278 = vmatmul.mubr.bf16.gmra.mrb[0].mxu0 %v1369
    %v2279 = vpop.f32.mrb[0].mxu0
    %v2280 = vadd.f32 %v1514, %v2279
    %v2281 = vpop.f32.mrb[0].mxu0
    %v2282 = vadd.f32 %v1518, %v2281
    %v2283 = vpop.f32.mrb[0].mxu0
    %v2284 = vpop.f32.mrb[0].mxu0
    %2285 = vdwg.mxu0
    %2286 = vmatprep.subr.bf16.mxu0 %v1974
    %2287 = vmatpush1.bf16.msra.mxu0 %v1973
    %2288 = vmatprep.subr.bf16.mxu0 %v1978
    %2289 = vmatpush1.bf16.msra.mxu0 %v1977
    %2290 = vmatprep.subr.bf16.mxu0 %v1982
    %2291 = vmatpush1.bf16.msra.mxu0 %v1981
    %2292 = vmatprep.subr.bf16.mxu0 %v1986
    %2293 = vmatpush1.bf16.msra.mxu0 %v1985
    %2294 = vmatprep.subr.bf16.mxu0 %v1990
    %2295 = vmatpush1.bf16.msra.mxu0 %v1989
    %2296 = vmatprep.subr.bf16.mxu0 %v1994
    %2297 = vmatpush1.bf16.msra.mxu0 %v1993
    %2298 = vmatprep.subr.bf16.mxu0 %v1998
    %2299 = vmatpush1.bf16.msra.mxu0 %v1997
    %2300 = vmatprep.subr.bf16.mxu0 %v2002
    %2301 = vmatpush1.bf16.msra.mxu0 %v2001
    %2302 = vmatprep.subr.bf16.mxu0 %v2006
    %2303 = vmatpush1.bf16.msra.mxu0 %v2005
    %2304 = vmatprep.subr.bf16.mxu0 %v2010
    %2305 = vmatpush1.bf16.msra.mxu0 %v2009
    %2306 = vmatprep.subr.bf16.mxu0 %v2014
    %2307 = vmatpush1.bf16.msra.mxu0 %v2013
    %2308 = vmatprep.subr.bf16.mxu0 %v2018
    %2309 = vmatpush1.bf16.msra.mxu0 %v2017
    %2310 = vmatprep.subr.bf16.mxu0 %v2022
    %2311 = vmatpush1.bf16.msra.mxu0 %v2021
    %2312 = vmatprep.subr.bf16.mxu0 %v2026
    %2313 = vmatpush1.bf16.msra.mxu0 %v2025
    %2314 = vmatprep.subr.bf16.mxu0 %v2030
    %2315 = vmatpush1.bf16.msra.mxu0 %v2029
    %2316 = vmatprep.subr.bf16.mxu0 %v2034
    %2317 = vmatpush1.bf16.msra.mxu0 %v2033
    %2318 = vmatprep.mubr.bf16.mxu0 %v1372
    %2319 = vmatmul.mubr.bf16.gmra.mrb[0].mxu0 %v1371
    %v2320 = vpop.f32.mrb[0].mxu0
    %v2321 = vadd.f32 %v2280, %v2320
    %v2322 = vpop.f32.mrb[0].mxu0
    %v2323 = vadd.f32 %v2282, %v2322
    %v2324 = vpop.f32.mrb[0].mxu0
    %v2325 = vpop.f32.mrb[0].mxu0
    %2326 = vdwg.mxu0
    %v2327 = vmax.f32 %v2239, 0.0
    %v2328 = vmax.f32 %v2241, 0.0
    %v2329 = vmax.f32 %v2321, 0.0
    %v2330 = vmax.f32 %v2323, 0.0
    %v2331 = vpack.c.bf16 %v2327, %v2327
    %v2332 = vpack.c.bf16 %v2328, %v2328
    %v2333 = vpack.c.bf16 %v2329, %v2329
    %v2334 = vpack.c.bf16 %v2330, %v2330
    %v2335 = vld [vmem:[#allocation13] sm:$0xf]
    %v2336 = vld [vmem:[#allocation13 + $0x4] sm:$0xf]
    %v2337 = vld [vmem:[#allocation13 + $0x8] sm:$0xf]
    %v2338 = vld [vmem:[#allocation13 + $0xc] sm:$0xf]
    %v2339 = vld [vmem:[#allocation13 + $0x10] sm:$0xf]
    %v2340 = vld [vmem:[#allocation13 + $0x14] sm:$0xf]
    %v2341 = vld [vmem:[#allocation13 + $0x18] sm:$0xf]
    %v2342 = vld [vmem:[#allocation13 + $0x1c] sm:$0xf]
    %v2343 = vld [vmem:[#allocation13 + $0x20] sm:$0xf]
    %v2344 = vld [vmem:[#allocation13 + $0x24] sm:$0xf]
    %v2345 = vld [vmem:[#allocation13 + $0x28] sm:$0xf]
    %v2346 = vld [vmem:[#allocation13 + $0x2c] sm:$0xf]
    %v2347 = vld [vmem:[#allocation13 + $0x30] sm:$0xf]
    %v2348 = vld [vmem:[#allocation13 + $0x34] sm:$0xf]
    %v2349 = vld [vmem:[#allocation13 + $0x38] sm:$0xf]
    %v2350 = vld [vmem:[#allocation13 + $0x3c] sm:$0xf]
    %v2351 = vld [vmem:[#allocation13 + $0x40] sm:$0xf]
    %v2352 = vld [vmem:[#allocation13 + $0x44] sm:$0xf]
    %v2353 = vld [vmem:[#allocation13 + $0x48] sm:$0xf]
    %v2354 = vld [vmem:[#allocation13 + $0x4c] sm:$0xf]
    %v2355 = vld [vmem:[#allocation13 + $0x50] sm:$0xf]
    %v2356 = vld [vmem:[#allocation13 + $0x54] sm:$0xf]
    %v2357 = vld [vmem:[#allocation13 + $0x58] sm:$0xf]
    %v2358 = vld [vmem:[#allocation13 + $0x5c] sm:$0xf]
    %v2359 = vld [vmem:[#allocation13 + $0x60] sm:$0xf]
    %v2360 = vld [vmem:[#allocation13 + $0x64] sm:$0xf]
    %v2361 = vld [vmem:[#allocation13 + $0x68] sm:$0xf]
    %v2362 = vld [vmem:[#allocation13 + $0x6c] sm:$0xf]
    %v2363 = vld [vmem:[#allocation13 + $0x70] sm:$0xf]
    %v2364 = vld [vmem:[#allocation13 + $0x74] sm:$0xf]
    %v2365 = vld [vmem:[#allocation13 + $0x78] sm:$0xf]
    %v2366 = vld [vmem:[#allocation13 + $0x7c] sm:$0xf]
    %v2367 = vld [vmem:[#allocation13 + $0x80] sm:$0xf]
    %v2368 = vld [vmem:[#allocation13 + $0x84] sm:$0xf]
    %v2369 = vld [vmem:[#allocation13 + $0x88] sm:$0xf]
    %v2370 = vld [vmem:[#allocation13 + $0x8c] sm:$0xf]
    %v2371 = vld [vmem:[#allocation13 + $0x90] sm:$0xf]
    %v2372 = vld [vmem:[#allocation13 + $0x94] sm:$0xf]
    %v2373 = vld [vmem:[#allocation13 + $0x98] sm:$0xf]
    %v2374 = vld [vmem:[#allocation13 + $0x9c] sm:$0xf]
    %v2375 = vld [vmem:[#allocation13 + $0xa0] sm:$0xf]
    %v2376 = vld [vmem:[#allocation13 + $0xa4] sm:$0xf]
    %v2377 = vld [vmem:[#allocation13 + $0xa8] sm:$0xf]
    %v2378 = vld [vmem:[#allocation13 + $0xac] sm:$0xf]
    %v2379 = vld [vmem:[#allocation13 + $0xb0] sm:$0xf]
    %v2380 = vld [vmem:[#allocation13 + $0xb4] sm:$0xf]
    %v2381 = vld [vmem:[#allocation13 + $0xb8] sm:$0xf]
    %v2382 = vld [vmem:[#allocation13 + $0xbc] sm:$0xf]
    %v2383 = vld [vmem:[#allocation13 + $0xc0] sm:$0xf]
    %v2384 = vld [vmem:[#allocation13 + $0xc4] sm:$0xf]
    %v2385 = vld [vmem:[#allocation13 + $0xc8] sm:$0xf]
    %v2386 = vld [vmem:[#allocation13 + $0xcc] sm:$0xf]
    %v2387 = vld [vmem:[#allocation13 + $0xd0] sm:$0xf]
    %v2388 = vld [vmem:[#allocation13 + $0xd4] sm:$0xf]
    %v2389 = vld [vmem:[#allocation13 + $0xd8] sm:$0xf]
    %v2390 = vld [vmem:[#allocation13 + $0xdc] sm:$0xf]
    %v2391 = vld [vmem:[#allocation13 + $0xe0] sm:$0xf]
    %v2392 = vld [vmem:[#allocation13 + $0xe4] sm:$0xf]
    %v2393 = vld [vmem:[#allocation13 + $0xe8] sm:$0xf]
    %v2394 = vld [vmem:[#allocation13 + $0xec] sm:$0xf]
    %v2395 = vld [vmem:[#allocation13 + $0xf0] sm:$0xf]
    %v2396 = vld [vmem:[#allocation13 + $0xf4] sm:$0xf]
    %v2397 = vld [vmem:[#allocation13 + $0xf8] sm:$0xf]
    %v2398 = vld [vmem:[#allocation13 + $0xfc] sm:$0xf]
    %v2399 = vld [vmem:[%s10] sm:$0x1]
    %v2401 = vlaneseq
    %v2402 = vshrl.u32 %v2401, 7
    %v2403 = vsub.s32 0, %v2402
    %v2404 = vrot.slane %v2399, %v2403
    %v2470 = vunpack.c.l.b16 %v2335
    %v2471 = vunpack.c.l.b16 %v2336
    %v2472 = vunpack.c.l.b16 %v2337
    %v2473 = vunpack.c.l.b16 %v2338
    %v2474 = vunpack.c.l.b16 %v2339
    %v2475 = vunpack.c.l.b16 %v2340
    %v2476 = vunpack.c.l.b16 %v2341
    %v2477 = vunpack.c.l.b16 %v2342
    %v2478 = vunpack.c.l.b16 %v2343
    %v2479 = vunpack.c.l.b16 %v2344
    %v2480 = vunpack.c.l.b16 %v2345
    %v2481 = vunpack.c.l.b16 %v2346
    %v2482 = vunpack.c.l.b16 %v2347
    %v2483 = vunpack.c.l.b16 %v2348
    %v2484 = vunpack.c.l.b16 %v2349
    %v2485 = vunpack.c.l.b16 %v2350
    %v2486 = vunpack.c.l.b16 %v2351
    %v2487 = vunpack.c.l.b16 %v2352
    %v2488 = vunpack.c.l.b16 %v2353
    %v2489 = vunpack.c.l.b16 %v2354
    %v2490 = vunpack.c.l.b16 %v2355
    %v2491 = vunpack.c.l.b16 %v2356
    %v2492 = vunpack.c.l.b16 %v2357
    %v2493 = vunpack.c.l.b16 %v2358
    %v2494 = vunpack.c.l.b16 %v2359
    %v2495 = vunpack.c.l.b16 %v2360
    %v2496 = vunpack.c.l.b16 %v2361
    %v2497 = vunpack.c.l.b16 %v2362
    %v2498 = vunpack.c.l.b16 %v2363
    %v2499 = vunpack.c.l.b16 %v2364
    %v2500 = vunpack.c.l.b16 %v2365
    %v2501 = vunpack.c.l.b16 %v2366
    %v2502 = vunpack.c.l.b16 %v2367
    %v2503 = vunpack.c.l.b16 %v2368
    %v2504 = vunpack.c.l.b16 %v2369
    %v2505 = vunpack.c.l.b16 %v2370
    %v2506 = vunpack.c.l.b16 %v2371
    %v2507 = vunpack.c.l.b16 %v2372
    %v2508 = vunpack.c.l.b16 %v2373
    %v2509 = vunpack.c.l.b16 %v2374
    %v2510 = vunpack.c.l.b16 %v2375
    %v2511 = vunpack.c.l.b16 %v2376
    %v2512 = vunpack.c.l.b16 %v2377
    %v2513 = vunpack.c.l.b16 %v2378
    %v2514 = vunpack.c.l.b16 %v2379
    %v2515 = vunpack.c.l.b16 %v2380
    %v2516 = vunpack.c.l.b16 %v2381
    %v2517 = vunpack.c.l.b16 %v2382
    %v2518 = vunpack.c.l.b16 %v2383
    %v2519 = vunpack.c.l.b16 %v2384
    %v2520 = vunpack.c.l.b16 %v2385
    %v2521 = vunpack.c.l.b16 %v2386
    %v2522 = vunpack.c.l.b16 %v2387
    %v2523 = vunpack.c.l.b16 %v2388
    %v2524 = vunpack.c.l.b16 %v2389
    %v2525 = vunpack.c.l.b16 %v2390
    %v2526 = vunpack.c.l.b16 %v2391
    %v2527 = vunpack.c.l.b16 %v2392
    %v2528 = vunpack.c.l.b16 %v2393
    %v2529 = vunpack.c.l.b16 %v2394
    %v2530 = vunpack.c.l.b16 %v2395
    %v2531 = vunpack.c.l.b16 %v2396
    %v2532 = vunpack.c.l.b16 %v2397
    %v2533 = vunpack.c.l.b16 %v2398
    %v2534 = vpack.c.b16 %v2471, %v2470
    %v2535 = vpack.c.b16 %v2473, %v2472
    %v2536 = vpack.c.b16 %v2475, %v2474
    %v2537 = vpack.c.b16 %v2477, %v2476
    %v2538 = vpack.c.b16 %v2479, %v2478
    %v2539 = vpack.c.b16 %v2481, %v2480
    %v2540 = vpack.c.b16 %v2483, %v2482
    %v2541 = vpack.c.b16 %v2485, %v2484
    %v2542 = vpack.c.b16 %v2487, %v2486
    %v2543 = vpack.c.b16 %v2489, %v2488
    %v2544 = vpack.c.b16 %v2491, %v2490
    %v2545 = vpack.c.b16 %v2493, %v2492
    %v2546 = vpack.c.b16 %v2495, %v2494
    %v2547 = vpack.c.b16 %v2497, %v2496
    %v2548 = vpack.c.b16 %v2499, %v2498
    %v2549 = vpack.c.b16 %v2501, %v2500
    %v2550 = vpack.c.b16 %v2503, %v2502
    %v2551 = vpack.c.b16 %v2505, %v2504
    %v2552 = vpack.c.b16 %v2507, %v2506
    %v2553 = vpack.c.b16 %v2509, %v2508
    %v2554 = vpack.c.b16 %v2511, %v2510
    %v2555 = vpack.c.b16 %v2513, %v2512
    %v2556 = vpack.c.b16 %v2515, %v2514
    %v2557 = vpack.c.b16 %v2517, %v2516
    %v2558 = vpack.c.b16 %v2519, %v2518
    %v2559 = vpack.c.b16 %v2521, %v2520
    %v2560 = vpack.c.b16 %v2523, %v2522
    %v2561 = vpack.c.b16 %v2525, %v2524
    %v2562 = vpack.c.b16 %v2527, %v2526
    %v2563 = vpack.c.b16 %v2529, %v2528
    %v2564 = vpack.c.b16 %v2531, %v2530
    %v2565 = vpack.c.b16 %v2533, %v2532
    %2598 = vmatprep.subr.bf16.mxu0 0
    %2599 = vmatpush1.bf16.msra.mxu0 %v2534
    %2600 = vmatprep.subr.bf16.mxu0 0
    %2601 = vmatpush1.bf16.msra.mxu0 %v2535
    %2602 = vmatprep.subr.bf16.mxu0 0
    %2603 = vmatpush1.bf16.msra.mxu0 %v2536
    %2604 = vmatprep.subr.bf16.mxu0 0
    %2605 = vmatpush1.bf16.msra.mxu0 %v2537
    %2606 = vmatprep.subr.bf16.mxu0 0
    %2607 = vmatpush1.bf16.msra.mxu0 %v2538
    %2608 = vmatprep.subr.bf16.mxu0 0
    %2609 = vmatpush1.bf16.msra.mxu0 %v2539
    %2610 = vmatprep.subr.bf16.mxu0 0
    %2611 = vmatpush1.bf16.msra.mxu0 %v2540
    %2612 = vmatprep.subr.bf16.mxu0 0
    %2613 = vmatpush1.bf16.msra.mxu0 %v2541
    %2614 = vmatprep.subr.bf16.mxu0 0
    %2615 = vmatpush1.bf16.msra.mxu0 %v2542
    %2616 = vmatprep.subr.bf16.mxu0 0
    %2617 = vmatpush1.bf16.msra.mxu0 %v2543
    %2618 = vmatprep.subr.bf16.mxu0 0
    %2619 = vmatpush1.bf16.msra.mxu0 %v2544
    %2620 = vmatprep.subr.bf16.mxu0 0
    %2621 = vmatpush1.bf16.msra.mxu0 %v2545
    %2622 = vmatprep.subr.bf16.mxu0 0
    %2623 = vmatpush1.bf16.msra.mxu0 %v2546
    %2624 = vmatprep.subr.bf16.mxu0 0
    %2625 = vmatpush1.bf16.msra.mxu0 %v2547
    %2626 = vmatprep.subr.bf16.mxu0 0
    %2627 = vmatpush1.bf16.msra.mxu0 %v2548
    %2628 = vmatprep.subr.bf16.mxu0 0
    %2629 = vmatpush1.bf16.msra.mxu0 %v2549
    %2630 = vmatprep.mubr.bf16.mxu0 %v2332
    %2631 = vmatmul.mubr.bf16.gmra.mrb[0].mxu0 %v2331
    %v2632 = vpop.f32.mrb[0].mxu0
    %v2633 = vadd.f32 %v2404, %v2632
    %v2634 = vpop.f32.mrb[0].mxu0
    %v2635 = vpop.f32.mrb[0].mxu0
    %v2636 = vpop.f32.mrb[0].mxu0
    %2637 = vdwg.mxu0
    %2638 = vmatprep.subr.bf16.mxu0 0
    %2639 = vmatpush1.bf16.msra.mxu0 %v2550
    %2640 = vmatprep.subr.bf16.mxu0 0
    %2641 = vmatpush1.bf16.msra.mxu0 %v2551
    %2642 = vmatprep.subr.bf16.mxu0 0
    %2643 = vmatpush1.bf16.msra.mxu0 %v2552
    %2644 = vmatprep.subr.bf16.mxu0 0
    %2645 = vmatpush1.bf16.msra.mxu0 %v2553
    %2646 = vmatprep.subr.bf16.mxu0 0
    %2647 = vmatpush1.bf16.msra.mxu0 %v2554
    %2648 = vmatprep.subr.bf16.mxu0 0
    %2649 = vmatpush1.bf16.msra.mxu0 %v2555
    %2650 = vmatprep.subr.bf16.mxu0 0
    %2651 = vmatpush1.bf16.msra.mxu0 %v2556
    %2652 = vmatprep.subr.bf16.mxu0 0
    %2653 = vmatpush1.bf16.msra.mxu0 %v2557
    %2654 = vmatprep.subr.bf16.mxu0 0
    %2655 = vmatpush1.bf16.msra.mxu0 %v2558
    %2656 = vmatprep.subr.bf16.mxu0 0
    %2657 = vmatpush1.bf16.msra.mxu0 %v2559
    %2658 = vmatprep.subr.bf16.mxu0 0
    %2659 = vmatpush1.bf16.msra.mxu0 %v2560
    %2660 = vmatprep.subr.bf16.mxu0 0
    %2661 = vmatpush1.bf16.msra.mxu0 %v2561
    %2662 = vmatprep.subr.bf16.mxu0 0
    %2663 = vmatpush1.bf16.msra.mxu0 %v2562
    %2664 = vmatprep.subr.bf16.mxu0 0
    %2665 = vmatpush1.bf16.msra.mxu0 %v2563
    %2666 = vmatprep.subr.bf16.mxu0 0
    %2667 = vmatpush1.bf16.msra.mxu0 %v2564
    %2668 = vmatprep.subr.bf16.mxu0 0
    %2669 = vmatpush1.bf16.msra.mxu0 %v2565
    %2670 = vmatprep.mubr.bf16.mxu0 %v2334
    %2671 = vmatmul.mubr.bf16.gmra.mrb[0].mxu0 %v2333
    %v2672 = vpop.f32.mrb[0].mxu0
    %v2673 = vadd.f32 %v2633, %v2672
    %v2674 = vpop.f32.mrb[0].mxu0
    %v2675 = vpop.f32.mrb[0].mxu0
    %v2676 = vpop.f32.mrb[0].mxu0
    %2677 = vdwg.mxu0
    %v2678 = vtanh.pop %v2673
    %v2679 = vpack.c.bf16 %v2678, %v2678
    %2680 = vst [vmem:[#allocation14] sm:$0xf] %v2679
    // Predicated region
    $region74: #{tpu_custom_call.1} parent=1 // pred_check
      _
    $region75: #{tpu_custom_call.1} parent=1 // pred_check_branch
      %2682 = sbr.rel (0) target = $region77
    $region76: #{tpu_custom_call.1} parent=1 // pred_region
      %s2684 = ssub.s32 64, 64
      %2685 = vsyncadd [#allocation4], %s2684
      %s2687 = sshll.u32 [#allocation14], 4
      %s2688 = int_to_ptr.vmem [resolvable:$true] %s2687
      %2690 = dma.vmem_to_hbm [thread:$0]  %s2688, 64, %s11, [#allocation4]
    $region77: #{tpu_custom_call.1} parent=1 // pred_fallthru
      _
    // Predicated region
    $region78: #{tpu_custom_call.1} parent=1 // pred_check
      _
    $region79: #{tpu_custom_call.1} parent=1 // pred_check_branch
      %2692 = sbr.rel (0) target = $region81
    $region80: #{tpu_custom_call.1} parent=1 // pred_region
      %2693 = dma.done [#allocation4], 64
    $region81: #{tpu_custom_call.1} parent=1 // pred_fallthru
      _
    %2694 = vsyncpa [#allocation3], 1
    %2695 = vsyncpa [#allocation6], 1
    %2696 = vsyncpa [#allocation9], 1
    %2697 = vsyncpa [#allocation12], 1
    %2698 = vsyncpa [#allocation4], 1

</llo_original>
